<compile_context>
chip_gen: v6e
topology: v6e:2x2x1
jax: 0.10.0
libtpu: 0.0.40
codegen_flags: <defaults>
</compile_context>

<pallas_src>
import functools

import jax
import jax.numpy as jnp
from jax.experimental import pallas as pl
from jax.experimental.pallas import tpu as pltpu

LN_EPS = 1e-5  # torch.nn.LayerNorm default


def _round_up(x, m):
    return ((x + m - 1) // m) * m


def _vmem_capacity_bytes():
    try:
        return int(pltpu.get_tpu_info().vmem_capacity_bytes)
    except Exception:
        return 64 * 2**20  # conservative (v7x per-TC VMEM)


def _ln_apply_in_bf16():
    """bf16 VALU exists on v6e / v7x; v5e and older get the (always-correct) f32 path."""
    try:
        kind = jax.devices()[0].device_kind.lower()
    except Exception:
        return False
    return not any(t in kind for t in ("v2", "v3", "v4", "v5"))


def _static_encoder_kernel(n_hidden, true_hidden_dims, ln_bf16, x_ref, *refs):
    """Fused MLP forward on one (tile_b, input_dim) batch tile.

    refs layout:
      for each hidden layer l: (w_l (bf16), vec_l (3, dim) = [bias, gamma, beta] f32)
      final layer:             (w_out (bf16), b_out (1, out_dim) f32)
      output:                  out_ref
    """
    out_ref = refs[-1]
    prefs = refs[:-1]

    x = x_ref[...].astype(jnp.float32)
    # torch.nan_to_num(x, nan=0.0) with +/-inf clamped to the largest finite bf16
    # value so they stay finite through the bf16 MXU matmul (PyTorch runs in f32
    # where f32-max stays finite).  Two-pass VALU: clip + isnan-select.
    big = jnp.float32(jnp.finfo(jnp.bfloat16).max)
    x = jnp.where(jnp.isnan(x), jnp.float32(0.0), jnp.clip(x, -big, big))
    h16 = x.astype(jnp.bfloat16)

    idx = 0
    for layer in range(n_hidden):
        w = prefs[idx][...]            # (prev, hid_p) bf16
        vec = prefs[idx + 1][...]      # (3, hid_p) f32: [bias, gamma, beta]
        idx += 2
        b = vec[0:1, :]
        gamma = vec[1:2, :]
        beta = vec[2:3, :]

        # Linear (bf16 MXU inputs, f32 accumulation) + ReLU.
        h = jnp.dot(h16, w, preferred_element_type=jnp.float32) + b
        h = jnp.maximum(h, 0.0)

        # LayerNorm over the TRUE hidden dim (padded lanes are exactly zero and
        # contribute nothing to the sums).  Fused one-pass statistics in f32.
        inv_n = jnp.float32(1.0 / float(true_hidden_dims[layer]))
        s = jnp.sum(h, axis=-1, keepdims=True)
        s2 = jnp.sum(h * h, axis=-1, keepdims=True)
        mean = s * inv_n
        var = jnp.maximum(s2 * inv_n - mean * mean, 0.0)
        rstd = jax.lax.rsqrt(var + LN_EPS)

        if ln_bf16:
            # Affine apply in bf16 (v6e/v7x VPU), fed straight into the next matmul.
            hn = ((h - mean) * rstd).astype(jnp.bfloat16)
            h16 = hn * gamma.astype(jnp.bfloat16) + beta.astype(jnp.bfloat16)
        else:
            # v5e: keep all elementwise math in f32, cast once for the next matmul.
            h16 = ((h - mean) * rstd * gamma + beta).astype(jnp.bfloat16)
        # Dropout: identity in eval mode (inference).

    w_out = prefs[idx][...]            # (prev, out_p) bf16
    b_out = prefs[idx + 1][...]        # (1, out_p) f32
    y = jnp.dot(h16, w_out, preferred_element_type=jnp.float32) + b_out
    out_ref[...] = y.astype(out_ref.dtype)


def pack_params(logical_params, input_dim, hidden_dims, output_dim):
    """Pack params into kernel layout.

    Hidden/output dims are zero-padded to multiples of 128 (lane-dense MXU tiles);
    the FIRST layer keeps its true contraction dim so x needs no lane padding.

    logical_params: (w1, b1, g1, be1, ..., w_out, b_out) with weights (in, out), f32.
    Returns tuple: (w1_bf16, vec1, ..., w_out_bf16, b_out).
    """
    packed = []
    prev_true = input_dim
    prev_p = input_dim              # first matmul contracts over the TRUE input_dim
    idx = 0
    for hd in hidden_dims:
        hd_p = _round_up(hd, 128)
        w, b, g, be = logical_params[idx:idx + 4]
        idx += 4
        w_p = jnp.zeros((prev_p, hd_p), jnp.float32).at[:prev_true, :hd].set(w)
        vec = jnp.zeros((3, hd_p), jnp.float32)
        vec = vec.at[0, :hd].set(jnp.reshape(b, (-1,)))
        vec = vec.at[1, :hd].set(jnp.reshape(g, (-1,)))
        vec = vec.at[2, :hd].set(jnp.reshape(be, (-1,)))
        packed += [w_p.astype(jnp.bfloat16), vec]
        prev_true, prev_p = hd, hd_p
    w_out, b_out = logical_params[idx], logical_params[idx + 1]
    out_p = _round_up(output_dim, 128)
    w_out_p = (jnp.zeros((prev_p, out_p), jnp.float32)
               .at[:prev_true, :output_dim].set(w_out))
    b_out_p = jnp.zeros((1, out_p), jnp.float32).at[:, :output_dim].set(
        jnp.reshape(b_out, (1, -1)))
    packed += [w_out_p.astype(jnp.bfloat16), b_out_p]
    return tuple(packed)


def static_features_encoder(x, packed_params, *, input_dim, hidden_dims,
                            output_dim, tile_b=512):
    """Run the fused StaticFeaturesEncoder forward pass (eval mode).

    Args:
      x: (batch, input_dim) float32 (may contain NaN / inf).
      packed_params: output of pack_params().
      input_dim / hidden_dims / output_dim: TRUE (unpadded) layer sizes.
      tile_b: max batch tile size (rows per grid step).

    Returns:
      (batch, output_dim) float32.
    """
    n_hidden = len(hidden_dims)
    batch = x.shape[0]
    out_p = packed_params[-1].shape[-1]

    vmem_cap = _vmem_capacity_bytes()
    ln_bf16 = _ln_apply_in_bf16()

    param_bytes = sum(int(p.size) * p.dtype.itemsize for p in packed_params)
    # TODO(synk): stream weights over an extra grid axis (layer/K tiling) when the
    # packed parameters exceed ~0.5x physical VMEM; the all-resident design below
    # assumes they fit (hits ~32 MiB of params on v7x, ~64 MiB on v5e/v6e).
    if 2 * param_bytes > vmem_cap // 2:
        raise ValueError("packed parameters too large for the VMEM-resident design")

    # --- batch tiling -------------------------------------------------------
    batch8 = _round_up(batch, 8)
    if batch8 >= 16:
        # Guarantee >= 2 grid steps so v7x's two TensorCores both get work.
        tile_b = min(tile_b, _round_up((batch8 + 1) // 2, 8))
    else:
        tile_b = 8
    tile_b = max(8, _round_up(tile_b, 8))

    max_dim_p = max([out_p, input_dim] + [w.shape[1] for w in packed_params[0::2]])

    def vmem_needed(tb, param_bufs):
        io = 2 * tb * (input_dim + out_p) * 4      # double-buffered x / out tiles
        act = 4 * tb * max_dim_p * 4               # a few f32 activation temporaries
        return param_bytes * param_bufs + io + act

    # Shrink the tile if (conservatively, double-buffered params) it would not fit.
    while tile_b > 8 and vmem_needed(tile_b, 2) > int(0.7 * vmem_cap):
        tile_b = max(8, _round_up(tile_b // 2, 8))

    batch_p = _round_up(batch, tile_b)
    x_in = x if batch_p == batch else jnp.pad(x, ((0, batch_p - batch), (0, 0)))
    grid = (batch_p // tile_b,)

    # --- specs ---------------------------------------------------------------
    # x: last block dim equals the full array dim (no lane padding needed).
    x_spec = pl.BlockSpec((tile_b, input_dim), lambda i: (i, 0))
    out_specs = pl.BlockSpec((tile_b, out_p), lambda i: (i, 0))

    def param_specs(single_buffer):
        specs = []
        for p in packed_params:
            if single_buffer:
                # Constant index_map + single buffer: DMA'd once, VMEM-resident,
                # no wasted second buffer.
                specs.append(pl.BlockSpec(p.shape, lambda i: (0, 0),
                                          pipeline_mode=pl.Buffered(1)))
            else:
                specs.append(pl.BlockSpec(p.shape, lambda i: (0, 0)))
        return specs

    # --- cost estimate (true dims) ------------------------------------------
    flops = 0
    prev = input_dim
    for d in list(hidden_dims) + [output_dim]:
        flops += 2 * batch_p * prev * d
        prev = d
    bytes_accessed = int(x_in.size) * 4 + batch_p * out_p * 4 + param_bytes
    cost = pl.CostEstimate(flops=flops,
                           transcendentals=batch_p * max(n_hidden, 1),
                           bytes_accessed=bytes_accessed)

    vmem_limit = int(0.75 * vmem_cap)  # ~96 MiB on v5e/v6e, ~48 MiB on v7x

    kernel = functools.partial(_static_encoder_kernel, n_hidden,
                               tuple(int(d) for d in hidden_dims), ln_bf16)

    def run(in_param_specs):
        return pl.pallas_call(
            kernel,
            out_shape=jax.ShapeDtypeStruct((batch_p, out_p), jnp.float32),
            grid=grid,
            in_specs=[x_spec] + in_param_specs,
            out_specs=out_specs,
            compiler_params=pltpu.CompilerParams(
                dimension_semantics=("parallel",),
                vmem_limit_bytes=vmem_limit),
            cost_estimate=cost,
        )(x_in, *packed_params)

    out_padded = None
    last_err = None
    for single_buffer in (True, False):
        try:
            out_padded = run(param_specs(single_buffer))
            break
        except Exception as e:  # fall back if pipeline_mode=Buffered(1) is rejected
            last_err = e
    if out_padded is None:
        raise last_err

    return out_padded[:batch, :output_dim]


def init_params(key, input_dim, hidden_dims, output_dim):
    """Deterministic PyTorch-style init; weights stored as (in_dim, out_dim), f32."""
    params = []
    prev_dim = input_dim
    for hidden_dim in hidden_dims:
        key, kw, kb = jax.random.split(key, 3)
        bound = 1.0 / jnp.sqrt(prev_dim)
        w = jax.random.uniform(kw, (prev_dim, hidden_dim), jnp.float32, -bound, bound)
        b = jax.random.uniform(kb, (1, hidden_dim), jnp.float32, -bound, bound)
        gamma = jnp.ones((1, hidden_dim), jnp.float32)   # LayerNorm weight
        beta = jnp.zeros((1, hidden_dim), jnp.float32)   # LayerNorm bias
        params += [w, b, gamma, beta]
        prev_dim = hidden_dim
    key, kw, kb = jax.random.split(key, 3)
    bound = 1.0 / jnp.sqrt(prev_dim)
    w_out = jax.random.uniform(kw, (prev_dim, output_dim), jnp.float32, -bound, bound)
    b_out = jax.random.uniform(kb, (1, output_dim), jnp.float32, -bound, bound)
    params += [w_out, b_out]
    return tuple(params)


def _reference_forward(x, logical_params, n_hidden):
    """Pure-JAX reference (eval mode) with the same bf16-matmul / clamp semantics."""
    big = jnp.float32(jnp.finfo(jnp.bfloat16).max)
    h = x.astype(jnp.float32)
    h = jnp.where(jnp.isnan(h), jnp.float32(0.0), jnp.clip(h, -big, big))
    idx = 0
    for _ in range(n_hidden):
        w, b, g, be = logical_params[idx:idx + 4]
        idx += 4
        h = jnp.dot(h.astype(jnp.bfloat16), w.astype(jnp.bfloat16),
                    preferred_element_type=jnp.float32) + b
        h = jnp.maximum(h, 0.0)
        mean = jnp.mean(h, axis=-1, keepdims=True)
        var = jnp.mean((h - mean) ** 2, axis=-1, keepdims=True)
        h = (h - mean) * jax.lax.rsqrt(var + LN_EPS) * g + be
    w_out, b_out = logical_params[idx], logical_params[idx + 1]
    return jnp.dot(h.astype(jnp.bfloat16), w_out.astype(jnp.bfloat16),
                   preferred_element_type=jnp.float32) + b_out


if __name__ == "__main__":
    # Small shapes consistent with the module: x is (batch, input_dim).
    # batch=48 exercises the multi-step ("parallel") batch grid.
    batch = 48
    input_dim = 16
    hidden_dims = [32, 32]
    output_dim = 8

    key = jax.random.PRNGKey(0)
    key, kx = jax.random.split(key)
    x = jax.random.normal(kx, (batch, input_dim), jnp.float32)
    # Inject NaNs to exercise nan_to_num semantics.
    x = x.at[0, 3].set(jnp.nan).at[5, 0].set(jnp.nan)

    logical_params = init_params(key, input_dim, hidden_dims, output_dim)
    packed = pack_params(logical_params, input_dim, hidden_dims, output_dim)

    out = static_features_encoder(x, packed, input_dim=input_dim,
                                  hidden_dims=hidden_dims, output_dim=output_dim)
    out = jax.block_until_ready(out)

    ref = _reference_forward(x, logical_params, len(hidden_dims))
    assert out.shape == (batch, output_dim)
    assert jnp.allclose(out, ref, atol=1e-2, rtol=1e-2), "mismatch vs reference"

    print("KERNEL_OK")
</pallas_src>

<mosaic_0001>
module attributes {stable_mosaic.version = 11 : i64} {
  func.func @_static_encoder_kernel(%arg0: i32, %arg1: memref<24x16xf32, #tpu.memory_space<vmem>>, %arg2: memref<16x128xbf16, #tpu.memory_space<vmem>>, %arg3: memref<3x128xf32, #tpu.memory_space<vmem>>, %arg4: memref<128x128xbf16, #tpu.memory_space<vmem>>, %arg5: memref<3x128xf32, #tpu.memory_space<vmem>>, %arg6: memref<128x128xbf16, #tpu.memory_space<vmem>>, %arg7: memref<1x128xf32, #tpu.memory_space<vmem>>, %arg8: memref<24x128xf32, #tpu.memory_space<vmem>>) attributes {dimension_semantics = [#tpu.dimension_semantics<parallel>], iteration_bounds = array<i64: 2>, scalar_prefetch = 0 : i64, scratch_operands = 0 : i64, tpu.core_type = #tpu.core_type<tc>, window_params = [{transform_indices = @transform_0, window_bounds = array<i64: 24, 16>}, {pipeline_mode = #tpu.pipeline_mode<synchronous>, transform_indices = @transform_1, window_bounds = array<i64: 16, 128>}, {pipeline_mode = #tpu.pipeline_mode<synchronous>, transform_indices = @transform_2, window_bounds = array<i64: 3, 128>}, {pipeline_mode = #tpu.pipeline_mode<synchronous>, transform_indices = @transform_3, window_bounds = array<i64: 128, 128>}, {pipeline_mode = #tpu.pipeline_mode<synchronous>, transform_indices = @transform_4, window_bounds = array<i64: 3, 128>}, {pipeline_mode = #tpu.pipeline_mode<synchronous>, transform_indices = @transform_5, window_bounds = array<i64: 128, 128>}, {pipeline_mode = #tpu.pipeline_mode<synchronous>, transform_indices = @transform_6, window_bounds = array<i64: 1, 128>}, {transform_indices = @transform_7, window_bounds = array<i64: 24, 128>}]} {
    %c0 = arith.constant 0 : index
    %c0_0 = arith.constant 0 : index
    %0 = vector.load %arg1[%c0, %c0_0] : memref<24x16xf32, #tpu.memory_space<vmem>>, vector<24x16xf32>
    %1 = arith.cmpf one, %0, %0 : vector<24x16xf32>
    %cst = arith.constant 0.000000e+00 : f32
    %cst_1 = arith.constant 3.38953139E+38 : f32
    %2 = arith.subf %cst, %cst_1 : f32
    %cst_2 = arith.constant 3.38953139E+38 : f32
    %3 = vector.broadcast %2 : f32 to vector<24x16xf32>
    %4 = arith.maximumf %3, %0 : vector<24x16xf32>
    %5 = vector.broadcast %cst_2 : f32 to vector<24x16xf32>
    %6 = arith.minimumf %5, %4 : vector<24x16xf32>
    %cst_3 = arith.constant 0.000000e+00 : f32
    %7 = vector.broadcast %cst_3 : f32 to vector<24x16xf32>
    %8 = arith.select %1, %7, %6 : vector<24x16xi1>, vector<24x16xf32>
    %9 = arith.truncf %8 : vector<24x16xf32> to vector<24x16xbf16>
    %c0_4 = arith.constant 0 : index
    %c0_5 = arith.constant 0 : index
    %10 = vector.load %arg2[%c0_4, %c0_5] : memref<16x128xbf16, #tpu.memory_space<vmem>>, vector<16x128xbf16>
    %c0_6 = arith.constant 0 : index
    %c0_7 = arith.constant 0 : index
    %11 = vector.load %arg3[%c0_6, %c0_7] : memref<3x128xf32, #tpu.memory_space<vmem>>, vector<3x128xf32>
    %12 = vector.extract_strided_slice %11 {offsets = [0, 0], sizes = [1, 128], strides = [1, 1]} : vector<3x128xf32> to vector<1x128xf32>
    %13 = vector.extract_strided_slice %11 {offsets = [1, 0], sizes = [1, 128], strides = [1, 1]} : vector<3x128xf32> to vector<1x128xf32>
    %14 = vector.extract_strided_slice %11 {offsets = [2, 0], sizes = [1, 128], strides = [1, 1]} : vector<3x128xf32> to vector<1x128xf32>
    %cst_8 = arith.constant dense<0.000000e+00> : vector<24x128xf32>
    %15 = tpu.matmul %9, %10, %cst_8 {dimension_numbers = #tpu.dot_dimension_numbers<[1], [0], [0], [1], [0, 0, 1, 1], [], []>} : vector<24x16xbf16>, vector<16x128xbf16>, vector<24x128xf32> -> vector<24x128xf32>
    %16 = vector.broadcast %12 : vector<1x128xf32> to vector<24x128xf32>
    %17 = arith.addf %15, %16 : vector<24x128xf32>
    %cst_9 = arith.constant 0.000000e+00 : f32
    %18 = vector.broadcast %cst_9 : f32 to vector<24x128xf32>
    %19 = arith.maximumf %17, %18 : vector<24x128xf32>
    %cst_10 = arith.constant dense<0.000000e+00> : vector<24xf32>
    %20 = vector.multi_reduction <add>, %19, %cst_10 [1] : vector<24x128xf32> to vector<24xf32>
    %21 = vector.shape_cast %20 : vector<24xf32> to vector<24x1xf32>
    %22 = arith.mulf %19, %19 : vector<24x128xf32>
    %cst_11 = arith.constant dense<0.000000e+00> : vector<24xf32>
    %23 = vector.multi_reduction <add>, %22, %cst_11 [1] : vector<24x128xf32> to vector<24xf32>
    %24 = vector.shape_cast %23 : vector<24xf32> to vector<24x1xf32>
    %cst_12 = arith.constant 3.125000e-02 : f32
    %25 = vector.broadcast %cst_12 : f32 to vector<24x1xf32>
    %26 = arith.mulf %21, %25 : vector<24x1xf32>
    %cst_13 = arith.constant 3.125000e-02 : f32
    %27 = vector.broadcast %cst_13 : f32 to vector<24x1xf32>
    %28 = arith.mulf %24, %27 : vector<24x1xf32>
    %29 = arith.mulf %26, %26 : vector<24x1xf32>
    %30 = arith.subf %28, %29 : vector<24x1xf32>
    %cst_14 = arith.constant 0.000000e+00 : f32
    %31 = vector.broadcast %cst_14 : f32 to vector<24x1xf32>
    %32 = arith.maximumf %30, %31 : vector<24x1xf32>
    %cst_15 = arith.constant 9.99999974E-6 : f32
    %33 = vector.broadcast %cst_15 : f32 to vector<24x1xf32>
    %34 = arith.addf %32, %33 : vector<24x1xf32>
    %35 = math.rsqrt %34 : vector<24x1xf32>
    %36 = vector.broadcast %26 : vector<24x1xf32> to vector<24x128xf32>
    %37 = arith.subf %19, %36 : vector<24x128xf32>
    %38 = vector.broadcast %35 : vector<24x1xf32> to vector<24x128xf32>
    %39 = arith.mulf %37, %38 : vector<24x128xf32>
    %40 = arith.truncf %39 : vector<24x128xf32> to vector<24x128xbf16>
    %41 = arith.truncf %13 : vector<1x128xf32> to vector<1x128xbf16>
    %42 = vector.broadcast %41 : vector<1x128xbf16> to vector<24x128xbf16>
    %43 = arith.mulf %40, %42 : vector<24x128xbf16>
    %44 = arith.truncf %14 : vector<1x128xf32> to vector<1x128xbf16>
    %45 = vector.broadcast %44 : vector<1x128xbf16> to vector<24x128xbf16>
    %46 = arith.addf %43, %45 : vector<24x128xbf16>
    %c0_16 = arith.constant 0 : index
    %c0_17 = arith.constant 0 : index
    %47 = vector.load %arg4[%c0_16, %c0_17] : memref<128x128xbf16, #tpu.memory_space<vmem>>, vector<128x128xbf16>
    %c0_18 = arith.constant 0 : index
    %c0_19 = arith.constant 0 : index
    %48 = vector.load %arg5[%c0_18, %c0_19] : memref<3x128xf32, #tpu.memory_space<vmem>>, vector<3x128xf32>
    %49 = vector.extract_strided_slice %48 {offsets = [0, 0], sizes = [1, 128], strides = [1, 1]} : vector<3x128xf32> to vector<1x128xf32>
    %50 = vector.extract_strided_slice %48 {offsets = [1, 0], sizes = [1, 128], strides = [1, 1]} : vector<3x128xf32> to vector<1x128xf32>
    %51 = vector.extract_strided_slice %48 {offsets = [2, 0], sizes = [1, 128], strides = [1, 1]} : vector<3x128xf32> to vector<1x128xf32>
    %cst_20 = arith.constant dense<0.000000e+00> : vector<24x128xf32>
    %52 = tpu.matmul %46, %47, %cst_20 {dimension_numbers = #tpu.dot_dimension_numbers<[1], [0], [0], [1], [0, 0, 1, 1], [], []>} : vector<24x128xbf16>, vector<128x128xbf16>, vector<24x128xf32> -> vector<24x128xf32>
    %53 = vector.broadcast %49 : vector<1x128xf32> to vector<24x128xf32>
    %54 = arith.addf %52, %53 : vector<24x128xf32>
    %cst_21 = arith.constant 0.000000e+00 : f32
    %55 = vector.broadcast %cst_21 : f32 to vector<24x128xf32>
    %56 = arith.maximumf %54, %55 : vector<24x128xf32>
    %cst_22 = arith.constant dense<0.000000e+00> : vector<24xf32>
    %57 = vector.multi_reduction <add>, %56, %cst_22 [1] : vector<24x128xf32> to vector<24xf32>
    %58 = vector.shape_cast %57 : vector<24xf32> to vector<24x1xf32>
    %59 = arith.mulf %56, %56 : vector<24x128xf32>
    %cst_23 = arith.constant dense<0.000000e+00> : vector<24xf32>
    %60 = vector.multi_reduction <add>, %59, %cst_23 [1] : vector<24x128xf32> to vector<24xf32>
    %61 = vector.shape_cast %60 : vector<24xf32> to vector<24x1xf32>
    %cst_24 = arith.constant 3.125000e-02 : f32
    %62 = vector.broadcast %cst_24 : f32 to vector<24x1xf32>
    %63 = arith.mulf %58, %62 : vector<24x1xf32>
    %cst_25 = arith.constant 3.125000e-02 : f32
    %64 = vector.broadcast %cst_25 : f32 to vector<24x1xf32>
    %65 = arith.mulf %61, %64 : vector<24x1xf32>
    %66 = arith.mulf %63, %63 : vector<24x1xf32>
    %67 = arith.subf %65, %66 : vector<24x1xf32>
    %cst_26 = arith.constant 0.000000e+00 : f32
    %68 = vector.broadcast %cst_26 : f32 to vector<24x1xf32>
    %69 = arith.maximumf %67, %68 : vector<24x1xf32>
    %cst_27 = arith.constant 9.99999974E-6 : f32
    %70 = vector.broadcast %cst_27 : f32 to vector<24x1xf32>
    %71 = arith.addf %69, %70 : vector<24x1xf32>
    %72 = math.rsqrt %71 : vector<24x1xf32>
    %73 = vector.broadcast %63 : vector<24x1xf32> to vector<24x128xf32>
    %74 = arith.subf %56, %73 : vector<24x128xf32>
    %75 = vector.broadcast %72 : vector<24x1xf32> to vector<24x128xf32>
    %76 = arith.mulf %74, %75 : vector<24x128xf32>
    %77 = arith.truncf %76 : vector<24x128xf32> to vector<24x128xbf16>
    %78 = arith.truncf %50 : vector<1x128xf32> to vector<1x128xbf16>
    %79 = vector.broadcast %78 : vector<1x128xbf16> to vector<24x128xbf16>
    %80 = arith.mulf %77, %79 : vector<24x128xbf16>
    %81 = arith.truncf %51 : vector<1x128xf32> to vector<1x128xbf16>
    %82 = vector.broadcast %81 : vector<1x128xbf16> to vector<24x128xbf16>
    %83 = arith.addf %80, %82 : vector<24x128xbf16>
    %c0_28 = arith.constant 0 : index
    %c0_29 = arith.constant 0 : index
    %84 = vector.load %arg6[%c0_28, %c0_29] : memref<128x128xbf16, #tpu.memory_space<vmem>>, vector<128x128xbf16>
    %c0_30 = arith.constant 0 : index
    %c0_31 = arith.constant 0 : index
    %85 = vector.load %arg7[%c0_30, %c0_31] : memref<1x128xf32, #tpu.memory_space<vmem>>, vector<1x128xf32>
    %cst_32 = arith.constant dense<0.000000e+00> : vector<24x128xf32>
    %86 = tpu.matmul %83, %84, %cst_32 {dimension_numbers = #tpu.dot_dimension_numbers<[1], [0], [0], [1], [0, 0, 1, 1], [], []>} : vector<24x128xbf16>, vector<128x128xbf16>, vector<24x128xf32> -> vector<24x128xf32>
    %87 = vector.broadcast %85 : vector<1x128xf32> to vector<24x128xf32>
    %88 = arith.addf %86, %87 : vector<24x128xf32>
    %c0_33 = arith.constant 0 : index
    %c0_34 = arith.constant 0 : index
    %89 = vector.load %arg8[%c0_33, %c0_34] : memref<24x128xf32, #tpu.memory_space<vmem>>, vector<24x128xf32>
    tpu.vector_store %arg8[%c0_33, %c0_34], %88 {strides = array<i32>} : memref<24x128xf32, #tpu.memory_space<vmem>>, vector<24x128xf32>,
    return
  }
  func.func @transform_0(%arg0: i32) -> (i32, i32) {
    %c0_i32 = arith.constant 0 : i32
    %c0_i32_0 = arith.constant 0 : i32
    return %arg0, %c0_i32 : i32, i32
  }
  func.func @transform_1(%arg0: i32) -> (i32, i32) {
    %c0_i32 = arith.constant 0 : i32
    %c0_i32_0 = arith.constant 0 : i32
    %c0_i32_1 = arith.constant 0 : i32
    return %c0_i32, %c0_i32_0 : i32, i32
  }
  func.func @transform_2(%arg0: i32) -> (i32, i32) {
    %c0_i32 = arith.constant 0 : i32
    %c0_i32_0 = arith.constant 0 : i32
    %c0_i32_1 = arith.constant 0 : i32
    return %c0_i32, %c0_i32_0 : i32, i32
  }
  func.func @transform_3(%arg0: i32) -> (i32, i32) {
    %c0_i32 = arith.constant 0 : i32
    %c0_i32_0 = arith.constant 0 : i32
    %c0_i32_1 = arith.constant 0 : i32
    return %c0_i32, %c0_i32_0 : i32, i32
  }
  func.func @transform_4(%arg0: i32) -> (i32, i32) {
    %c0_i32 = arith.constant 0 : i32
    %c0_i32_0 = arith.constant 0 : i32
    %c0_i32_1 = arith.constant 0 : i32
    return %c0_i32, %c0_i32_0 : i32, i32
  }
  func.func @transform_5(%arg0: i32) -> (i32, i32) {
    %c0_i32 = arith.constant 0 : i32
    %c0_i32_0 = arith.constant 0 : i32
    %c0_i32_1 = arith.constant 0 : i32
    return %c0_i32, %c0_i32_0 : i32, i32
  }
  func.func @transform_6(%arg0: i32) -> (i32, i32) {
    %c0_i32 = arith.constant 0 : i32
    %c0_i32_0 = arith.constant 0 : i32
    %c0_i32_1 = arith.constant 0 : i32
    return %c0_i32, %c0_i32_0 : i32, i32
  }
  func.func @transform_7(%arg0: i32) -> (i32, i32) {
    %c0_i32 = arith.constant 0 : i32
    %c0_i32_0 = arith.constant 0 : i32
    return %arg0, %c0_i32 : i32, i32
  }
}

module attributes {stable_mosaic.version = 11 : i64} {
  func.func @_static_encoder_kernel(%arg0: i32, %arg1: memref<24x16xf32, #tpu.memory_space<vmem>>, %arg2: memref<16x128xbf16, #tpu.memory_space<vmem>>, %arg3: memref<3x128xf32, #tpu.memory_space<vmem>>, %arg4: memref<128x128xbf16, #tpu.memory_space<vmem>>, %arg5: memref<3x128xf32, #tpu.memory_space<vmem>>, %arg6: memref<128x128xbf16, #tpu.memory_space<vmem>>, %arg7: memref<1x128xf32, #tpu.memory_space<vmem>>, %arg8: memref<24x128xf32, #tpu.memory_space<vmem>>) attributes {dimension_semantics = [#tpu.dimension_semantics<parallel>], iteration_bounds = array<i64: 2>, scalar_prefetch = 0 : i64, scratch_operands = 0 : i64, tpu.core_type = #tpu.core_type<tc>, window_params = [{transform_indices = @transform_0, window_bounds = array<i64: 24, 16>}, {pipeline_mode = #tpu.pipeline_mode<synchronous>, transform_indices = @transform_1, window_bounds = array<i64: 16, 128>}, {pipeline_mode = #tpu.pipeline_mode<synchronous>, transform_indices = @transform_2, window_bounds = array<i64: 3, 128>}, {pipeline_mode = #tpu.pipeline_mode<synchronous>, transform_indices = @transform_3, window_bounds = array<i64: 128, 128>}, {pipeline_mode = #tpu.pipeline_mode<synchronous>, transform_indices = @transform_4, window_bounds = array<i64: 3, 128>}, {pipeline_mode = #tpu.pipeline_mode<synchronous>, transform_indices = @transform_5, window_bounds = array<i64: 128, 128>}, {pipeline_mode = #tpu.pipeline_mode<synchronous>, transform_indices = @transform_6, window_bounds = array<i64: 1, 128>}, {transform_indices = @transform_7, window_bounds = array<i64: 24, 128>}]} {
    %c0 = arith.constant 0 : index
    %c0_0 = arith.constant 0 : index
    %0 = vector.load %arg1[%c0, %c0_0] : memref<24x16xf32, #tpu.memory_space<vmem>>, vector<24x16xf32>
    %1 = arith.cmpf one, %0, %0 : vector<24x16xf32>
    %cst = arith.constant 0.000000e+00 : f32
    %cst_1 = arith.constant 3.38953139E+38 : f32
    %2 = arith.subf %cst, %cst_1 : f32
    %cst_2 = arith.constant 3.38953139E+38 : f32
    %3 = vector.broadcast %2 : f32 to vector<24x16xf32>
    %4 = arith.maximumf %3, %0 : vector<24x16xf32>
    %5 = vector.broadcast %cst_2 : f32 to vector<24x16xf32>
    %6 = arith.minimumf %5, %4 : vector<24x16xf32>
    %cst_3 = arith.constant 0.000000e+00 : f32
    %7 = vector.broadcast %cst_3 : f32 to vector<24x16xf32>
    %8 = arith.select %1, %7, %6 : vector<24x16xi1>, vector<24x16xf32>
    %9 = arith.truncf %8 : vector<24x16xf32> to vector<24x16xbf16>
    %c0_4 = arith.constant 0 : index
    %c0_5 = arith.constant 0 : index
    %10 = vector.load %arg2[%c0_4, %c0_5] : memref<16x128xbf16, #tpu.memory_space<vmem>>, vector<16x128xbf16>
    %c0_6 = arith.constant 0 : index
    %c0_7 = arith.constant 0 : index
    %11 = vector.load %arg3[%c0_6, %c0_7] : memref<3x128xf32, #tpu.memory_space<vmem>>, vector<3x128xf32>
    %12 = vector.extract_strided_slice %11 {offsets = [0, 0], sizes = [1, 128], strides = [1, 1]} : vector<3x128xf32> to vector<1x128xf32>
    %13 = vector.extract_strided_slice %11 {offsets = [1, 0], sizes = [1, 128], strides = [1, 1]} : vector<3x128xf32> to vector<1x128xf32>
    %14 = vector.extract_strided_slice %11 {offsets = [2, 0], sizes = [1, 128], strides = [1, 1]} : vector<3x128xf32> to vector<1x128xf32>
    %cst_8 = arith.constant dense<0.000000e+00> : vector<24x128xf32>
    %15 = tpu.matmul %9, %10, %cst_8 {dimension_numbers = #tpu.dot_dimension_numbers<[1], [0], [0], [1], [0, 0, 1, 1], [], []>} : vector<24x16xbf16>, vector<16x128xbf16>, vector<24x128xf32> -> vector<24x128xf32>
    %16 = vector.broadcast %12 : vector<1x128xf32> to vector<24x128xf32>
    %17 = arith.addf %15, %16 : vector<24x128xf32>
    %cst_9 = arith.constant 0.000000e+00 : f32
    %18 = vector.broadcast %cst_9 : f32 to vector<24x128xf32>
    %19 = arith.maximumf %17, %18 : vector<24x128xf32>
    %cst_10 = arith.constant dense<0.000000e+00> : vector<24xf32>
    %20 = vector.multi_reduction <add>, %19, %cst_10 [1] : vector<24x128xf32> to vector<24xf32>
    %21 = vector.shape_cast %20 : vector<24xf32> to vector<24x1xf32>
    %22 = arith.mulf %19, %19 : vector<24x128xf32>
    %cst_11 = arith.constant dense<0.000000e+00> : vector<24xf32>
    %23 = vector.multi_reduction <add>, %22, %cst_11 [1] : vector<24x128xf32> to vector<24xf32>
    %24 = vector.shape_cast %23 : vector<24xf32> to vector<24x1xf32>
    %cst_12 = arith.constant 3.125000e-02 : f32
    %25 = vector.broadcast %cst_12 : f32 to vector<24x1xf32>
    %26 = arith.mulf %21, %25 : vector<24x1xf32>
    %cst_13 = arith.constant 3.125000e-02 : f32
    %27 = vector.broadcast %cst_13 : f32 to vector<24x1xf32>
    %28 = arith.mulf %24, %27 : vector<24x1xf32>
    %29 = arith.mulf %26, %26 : vector<24x1xf32>
    %30 = arith.subf %28, %29 : vector<24x1xf32>
    %cst_14 = arith.constant 0.000000e+00 : f32
    %31 = vector.broadcast %cst_14 : f32 to vector<24x1xf32>
    %32 = arith.maximumf %30, %31 : vector<24x1xf32>
    %cst_15 = arith.constant 9.99999974E-6 : f32
    %33 = vector.broadcast %cst_15 : f32 to vector<24x1xf32>
    %34 = arith.addf %32, %33 : vector<24x1xf32>
    %35 = math.rsqrt %34 : vector<24x1xf32>
    %36 = vector.broadcast %26 : vector<24x1xf32> to vector<24x128xf32>
    %37 = arith.subf %19, %36 : vector<24x128xf32>
    %38 = vector.broadcast %35 : vector<24x1xf32> to vector<24x128xf32>
    %39 = arith.mulf %37, %38 : vector<24x128xf32>
    %40 = arith.truncf %39 : vector<24x128xf32> to vector<24x128xbf16>
    %41 = arith.truncf %13 : vector<1x128xf32> to vector<1x128xbf16>
    %42 = vector.broadcast %41 : vector<1x128xbf16> to vector<24x128xbf16>
    %43 = arith.mulf %40, %42 : vector<24x128xbf16>
    %44 = arith.truncf %14 : vector<1x128xf32> to vector<1x128xbf16>
    %45 = vector.broadcast %44 : vector<1x128xbf16> to vector<24x128xbf16>
    %46 = arith.addf %43, %45 : vector<24x128xbf16>
    %c0_16 = arith.constant 0 : index
    %c0_17 = arith.constant 0 : index
    %47 = vector.load %arg4[%c0_16, %c0_17] : memref<128x128xbf16, #tpu.memory_space<vmem>>, vector<128x128xbf16>
    %c0_18 = arith.constant 0 : index
    %c0_19 = arith.constant 0 : index
    %48 = vector.load %arg5[%c0_18, %c0_19] : memref<3x128xf32, #tpu.memory_space<vmem>>, vector<3x128xf32>
    %49 = vector.extract_strided_slice %48 {offsets = [0, 0], sizes = [1, 128], strides = [1, 1]} : vector<3x128xf32> to vector<1x128xf32>
    %50 = vector.extract_strided_slice %48 {offsets = [1, 0], sizes = [1, 128], strides = [1, 1]} : vector<3x128xf32> to vector<1x128xf32>
    %51 = vector.extract_strided_slice %48 {offsets = [2, 0], sizes = [1, 128], strides = [1, 1]} : vector<3x128xf32> to vector<1x128xf32>
    %cst_20 = arith.constant dense<0.000000e+00> : vector<24x128xf32>
    %52 = tpu.matmul %46, %47, %cst_20 {dimension_numbers = #tpu.dot_dimension_numbers<[1], [0], [0], [1], [0, 0, 1, 1], [], []>} : vector<24x128xbf16>, vector<128x128xbf16>, vector<24x128xf32> -> vector<24x128xf32>
    %53 = vector.broadcast %49 : vector<1x128xf32> to vector<24x128xf32>
    %54 = arith.addf %52, %53 : vector<24x128xf32>
    %cst_21 = arith.constant 0.000000e+00 : f32
    %55 = vector.broadcast %cst_21 : f32 to vector<24x128xf32>
    %56 = arith.maximumf %54, %55 : vector<24x128xf32>
    %cst_22 = arith.constant dense<0.000000e+00> : vector<24xf32>
    %57 = vector.multi_reduction <add>, %56, %cst_22 [1] : vector<24x128xf32> to vector<24xf32>
    %58 = vector.shape_cast %57 : vector<24xf32> to vector<24x1xf32>
    %59 = arith.mulf %56, %56 : vector<24x128xf32>
    %cst_23 = arith.constant dense<0.000000e+00> : vector<24xf32>
    %60 = vector.multi_reduction <add>, %59, %cst_23 [1] : vector<24x128xf32> to vector<24xf32>
    %61 = vector.shape_cast %60 : vector<24xf32> to vector<24x1xf32>
    %cst_24 = arith.constant 3.125000e-02 : f32
    %62 = vector.broadcast %cst_24 : f32 to vector<24x1xf32>
    %63 = arith.mulf %58, %62 : vector<24x1xf32>
    %cst_25 = arith.constant 3.125000e-02 : f32
    %64 = vector.broadcast %cst_25 : f32 to vector<24x1xf32>
    %65 = arith.mulf %61, %64 : vector<24x1xf32>
    %66 = arith.mulf %63, %63 : vector<24x1xf32>
    %67 = arith.subf %65, %66 : vector<24x1xf32>
    %cst_26 = arith.constant 0.000000e+00 : f32
    %68 = vector.broadcast %cst_26 : f32 to vector<24x1xf32>
    %69 = arith.maximumf %67, %68 : vector<24x1xf32>
    %cst_27 = arith.constant 9.99999974E-6 : f32
    %70 = vector.broadcast %cst_27 : f32 to vector<24x1xf32>
    %71 = arith.addf %69, %70 : vector<24x1xf32>
    %72 = math.rsqrt %71 : vector<24x1xf32>
    %73 = vector.broadcast %63 : vector<24x1xf32> to vector<24x128xf32>
    %74 = arith.subf %56, %73 : vector<24x128xf32>
    %75 = vector.broadcast %72 : vector<24x1xf32> to vector<24x128xf32>
    %76 = arith.mulf %74, %75 : vector<24x128xf32>
    %77 = arith.truncf %76 : vector<24x128xf32> to vector<24x128xbf16>
    %78 = arith.truncf %50 : vector<1x128xf32> to vector<1x128xbf16>
    %79 = vector.broadcast %78 : vector<1x128xbf16> to vector<24x128xbf16>
    %80 = arith.mulf %77, %79 : vector<24x128xbf16>
    %81 = arith.truncf %51 : vector<1x128xf32> to vector<1x128xbf16>
    %82 = vector.broadcast %81 : vector<1x128xbf16> to vector<24x128xbf16>
    %83 = arith.addf %80, %82 : vector<24x128xbf16>
    %c0_28 = arith.constant 0 : index
    %c0_29 = arith.constant 0 : index
    %84 = vector.load %arg6[%c0_28, %c0_29] : memref<128x128xbf16, #tpu.memory_space<vmem>>, vector<128x128xbf16>
    %c0_30 = arith.constant 0 : index
    %c0_31 = arith.constant 0 : index
    %85 = vector.load %arg7[%c0_30, %c0_31] : memref<1x128xf32, #tpu.memory_space<vmem>>, vector<1x128xf32>
    %cst_32 = arith.constant dense<0.000000e+00> : vector<24x128xf32>
    %86 = tpu.matmul %83, %84, %cst_32 {dimension_numbers = #tpu.dot_dimension_numbers<[1], [0], [0], [1], [0, 0, 1, 1], [], []>} : vector<24x128xbf16>, vector<128x128xbf16>, vector<24x128xf32> -> vector<24x128xf32>
    %87 = vector.broadcast %85 : vector<1x128xf32> to vector<24x128xf32>
    %88 = arith.addf %86, %87 : vector<24x128xf32>
    %c0_33 = arith.constant 0 : index
    %c0_34 = arith.constant 0 : index
    %89 = vector.load %arg8[%c0_33, %c0_34] : memref<24x128xf32, #tpu.memory_space<vmem>>, vector<24x128xf32>
    tpu.vector_store %arg8[%c0_33, %c0_34], %88 {strides = array<i32>} : memref<24x128xf32, #tpu.memory_space<vmem>>, vector<24x128xf32>,
    return
  }
  func.func @transform_0(%arg0: i32) -> (i32, i32) {
    %c0_i32 = arith.constant 0 : i32
    %c0_i32_0 = arith.constant 0 : i32
    return %arg0, %c0_i32 : i32, i32
  }
  func.func @transform_1(%arg0: i32) -> (i32, i32) {
    %c0_i32 = arith.constant 0 : i32
    %c0_i32_0 = arith.constant 0 : i32
    %c0_i32_1 = arith.constant 0 : i32
    return %c0_i32, %c0_i32_0 : i32, i32
  }
  func.func @transform_2(%arg0: i32) -> (i32, i32) {
    %c0_i32 = arith.constant 0 : i32
    %c0_i32_0 = arith.constant 0 : i32
    %c0_i32_1 = arith.constant 0 : i32
    return %c0_i32, %c0_i32_0 : i32, i32
  }
  func.func @transform_3(%arg0: i32) -> (i32, i32) {
    %c0_i32 = arith.constant 0 : i32
    %c0_i32_0 = arith.constant 0 : i32
    %c0_i32_1 = arith.constant 0 : i32
    return %c0_i32, %c0_i32_0 : i32, i32
  }
  func.func @transform_4(%arg0: i32) -> (i32, i32) {
    %c0_i32 = arith.constant 0 : i32
    %c0_i32_0 = arith.constant 0 : i32
    %c0_i32_1 = arith.constant 0 : i32
    return %c0_i32, %c0_i32_0 : i32, i32
  }
  func.func @transform_5(%arg0: i32) -> (i32, i32) {
    %c0_i32 = arith.constant 0 : i32
    %c0_i32_0 = arith.constant 0 : i32
    %c0_i32_1 = arith.constant 0 : i32
    return %c0_i32, %c0_i32_0 : i32, i32
  }
  func.func @transform_6(%arg0: i32) -> (i32, i32) {
    %c0_i32 = arith.constant 0 : i32
    %c0_i32_0 = arith.constant 0 : i32
    %c0_i32_1 = arith.constant 0 : i32
    return %c0_i32, %c0_i32_0 : i32, i32
  }
  func.func @transform_7(%arg0: i32) -> (i32, i32) {
    %c0_i32 = arith.constant 0 : i32
    %c0_i32_0 = arith.constant 0 : i32
    return %arg0, %c0_i32 : i32, i32
  }
}

</mosaic_0001>

<llo_original>
// kernel: tpu_custom_call.1
$region0: #{tpu_custom_call.1}
  #allocation0 [shape = 'u32[]', space=smem, size = 0x4, offset = 0x4, fixed_abs, tag = 'smem constant byte address 0x4 - core index']
  #allocation1 [shape = 'u32[144,128]{1,0:T(1,128)}', space=vmem, size = 0x12000, scoped, tag = 'internal scratch']
  %s0 = inlined_call_operand.vmem [shape: f32[48,16], index: 0, kind: input, shape index: {}]
  %s1 = inlined_call_operand.hbm [shape: bf16[16,128], index: 1, kind: input, shape index: {}]
  %s2 = inlined_call_operand.vmem [shape: f32[3,128], index: 2, kind: input, shape index: {}]
  %s3 = inlined_call_operand.vmem [shape: bf16[128,128], index: 3, kind: input, shape index: {}]
  %s4 = inlined_call_operand.hbm [shape: f32[3,128], index: 4, kind: input, shape index: {}]
  %s5 = inlined_call_operand.hbm [shape: bf16[128,128], index: 5, kind: input, shape index: {}]
  %s6 = inlined_call_operand.vmem [shape: f32[1,128], index: 6, kind: input, shape index: {}]
  %s7 = inlined_call_operand.hbm [shape: f32[48,128], index: 7, kind: output, shape index: {}]
  %s8 = sld [smem:[#allocation0]]
  $region73: #{tpu_custom_call.1} parent=0
    _
  %s10 = ssub.s32 1, %s8
  %s11 = scalar_select 0, %s10, %s8
  $region1: #{tpu_custom_call.1} parent=0
    #allocation2 [shape = 'u8[4096]{0}', space=vmem, size = 0x1000, scoped, tag = 'input window, operand 1, single buffered']
    #allocation3 [shape = 's32[2]{0}', space=sflag, size = 0x8, scoped, tag = 'scoped memory for tpu_custom_call.1']
    #allocation4 [shape = 's32[2]{0}', space=sflag, size = 0x8, scoped, tag = 'scoped memory for tpu_custom_call.1']
    #allocation5 [shape = 'u8[2048]{0}', space=vmem, size = 0x800, scoped, tag = 'input window, operand 4, single buffered']
    #allocation6 [shape = 's32[1]{0}', space=sflag, size = 0x4, scoped, tag = 'scoped memory for tpu_custom_call.1']
    #allocation7 [shape = 'u8[32768]{0}', space=vmem, size = 0x8000, scoped, tag = 'input window, operand 5, single buffered']
    #allocation8 [shape = 'u8[24576]{0}', space=vmem, size = 0x6000, scoped, tag = 'output window, operand 0']
    %12 = vsyncpa [#allocation3], 0
    %13 = vsyncpa [#allocation6], 0
    %14 = vsyncpa [#allocation4], 0
    %s15 = scalar_lea.sflag [#allocation4], 1
    %16 = vsyncpa %s15, 0
    loop: start=0, step=1, limit=4
    $region2: #{tpu_custom_call.1} parent=1 // loop_pre_header
      _
    $region3: #{tpu_custom_call.1} parent=1 // loop_header
      %s18 = sphi 0, %s22
      %p19 = scmp.ge.s32.totalorder %s18, 4
      %s28 = sphi 0, %s30
      %s31 = sphi 0, %s28
      %s32 = sphi 0, %s31
      %s48 = sphi 0, %s32
      %s52 = sphi 0, %s52
      %s54 = sphi 0, %s52
      %s55 = sphi 0, %s54
      %s69 = sphi 0, %s55
      %s73 = sphi 0, %s73
      %s75 = sphi 0, %s73
      %s76 = sphi 0, %s75
      %s90 = sphi 0, %s76
      %s94 = sphi 0, %s94
      %s96 = sphi 0, %s94
      %s97 = sphi 0, %s96
      %s111 = sphi 0, %s97
      %s115 = sphi 0, %s115
      %s117 = sphi 0, %s115
      %s118 = sphi 0, %s117
      %s132 = sphi 0, %s118
      %s136 = sphi 0, %s136
      %s138 = sphi 0, %s136
      %s139 = sphi 0, %s138
      %s153 = sphi 0, %s139
      %s157 = sphi 0, %s157
      %s159 = sphi 0, %s157
      %s160 = sphi 0, %s159
      %s174 = sphi 0, %s160
      %s180 = sphi 0, %s182
      %s183 = sphi 0, %s180
      %s184 = sphi 0, %s183
      %s200 = sphi 0, %s184
    $region4: #{tpu_custom_call.1} parent=1 // loop_header_branch
      %21 = sbr.rel (%p19) target = $region8
    $region5: #{tpu_custom_call.1} parent=1 // loop_body
      %s23 = ssub.s32 %s18, 1
      %s24 = ssub.s32 %s18, 2
      %s25 = sadd.s32 %s18, 1
      %s26 = ssub.s32 %s18, %s25
      %p27 = scmp.eq.s32.totalorder %s26, 0
      %s29 = sadd.s32 %s28, 1
      %s30 = scalar_select %p27, %s28, %s29
      %p33 = pneg %p27
      %p34 = scmp.eq.s32.totalorder %s18, 1
      %p35 = por %p33, %p34
      %p36 = scmp.ne.s32.totalorder %s28, %s31
      %p37 = scmp.eq.s32.totalorder %s18, 0
      %p38 = por %p36, %p37
      %p39 = scmp.ne.s32.totalorder %s28, %s31
      %p40 = scmp.eq.s32.totalorder %s23, 1
      %p41 = por %p39, %p40
      %p42 = scmp.ne.s32.totalorder %s31, %s32
      %p43 = scmp.eq.s32.totalorder %s23, 0
      %p44 = por %p42, %p43
      %p45 = scmp.ne.s32.totalorder %s31, %s32
      %p46 = scmp.eq.s32.totalorder %s24, 1
      %p47 = por %p45, %p46
      %p49 = scmp.ne.s32.totalorder %s32, %s48
      %p50 = scmp.eq.s32.totalorder %s24, 0
      %p51 = por %p49, %p50
      %s53 = sadd.s32 %s52, 1
      %p56 = scmp.eq.s32.totalorder %s18, 1
      %p57 = scmp.ne.s32.totalorder %s52, %s54
      %p58 = scmp.eq.s32.totalorder %s18, 0
      %p59 = por %p57, %p58
      %p60 = scmp.ne.s32.totalorder %s52, %s54
      %p61 = scmp.eq.s32.totalorder %s23, 1
      %p62 = por %p60, %p61
      %p63 = scmp.ne.s32.totalorder %s54, %s55
      %p64 = scmp.eq.s32.totalorder %s23, 0
      %p65 = por %p63, %p64
      %p66 = scmp.ne.s32.totalorder %s54, %s55
      %p67 = scmp.eq.s32.totalorder %s24, 1
      %p68 = por %p66, %p67
      %p70 = scmp.ne.s32.totalorder %s55, %s69
      %p71 = scmp.eq.s32.totalorder %s24, 0
      %p72 = por %p70, %p71
      %s74 = sadd.s32 %s73, 1
      %p77 = scmp.eq.s32.totalorder %s18, 1
      %p78 = scmp.ne.s32.totalorder %s73, %s75
      %p79 = scmp.eq.s32.totalorder %s18, 0
      %p80 = por %p78, %p79
      %p81 = scmp.ne.s32.totalorder %s73, %s75
      %p82 = scmp.eq.s32.totalorder %s23, 1
      %p83 = por %p81, %p82
      %p84 = scmp.ne.s32.totalorder %s75, %s76
      %p85 = scmp.eq.s32.totalorder %s23, 0
      %p86 = por %p84, %p85
      %p87 = scmp.ne.s32.totalorder %s75, %s76
      %p88 = scmp.eq.s32.totalorder %s24, 1
      %p89 = por %p87, %p88
      %p91 = scmp.ne.s32.totalorder %s76, %s90
      %p92 = scmp.eq.s32.totalorder %s24, 0
      %p93 = por %p91, %p92
      %s95 = sadd.s32 %s94, 1
      %p98 = scmp.eq.s32.totalorder %s18, 1
      %p99 = scmp.ne.s32.totalorder %s94, %s96
      %p100 = scmp.eq.s32.totalorder %s18, 0
      %p101 = por %p99, %p100
      %p102 = scmp.ne.s32.totalorder %s94, %s96
      %p103 = scmp.eq.s32.totalorder %s23, 1
      %p104 = por %p102, %p103
      %p105 = scmp.ne.s32.totalorder %s96, %s97
      %p106 = scmp.eq.s32.totalorder %s23, 0
      %p107 = por %p105, %p106
      %p108 = scmp.ne.s32.totalorder %s96, %s97
      %p109 = scmp.eq.s32.totalorder %s24, 1
      %p110 = por %p108, %p109
      %p112 = scmp.ne.s32.totalorder %s97, %s111
      %p113 = scmp.eq.s32.totalorder %s24, 0
      %p114 = por %p112, %p113
      %s116 = sadd.s32 %s115, 1
      %p119 = scmp.eq.s32.totalorder %s18, 1
      %p120 = scmp.ne.s32.totalorder %s115, %s117
      %p121 = scmp.eq.s32.totalorder %s18, 0
      %p122 = por %p120, %p121
      %p123 = scmp.ne.s32.totalorder %s115, %s117
      %p124 = scmp.eq.s32.totalorder %s23, 1
      %p125 = por %p123, %p124
      %p126 = scmp.ne.s32.totalorder %s117, %s118
      %p127 = scmp.eq.s32.totalorder %s23, 0
      %p128 = por %p126, %p127
      %p129 = scmp.ne.s32.totalorder %s117, %s118
      %p130 = scmp.eq.s32.totalorder %s24, 1
      %p131 = por %p129, %p130
      %p133 = scmp.ne.s32.totalorder %s118, %s132
      %p134 = scmp.eq.s32.totalorder %s24, 0
      %p135 = por %p133, %p134
      %s137 = sadd.s32 %s136, 1
      %p140 = scmp.eq.s32.totalorder %s18, 1
      %p141 = scmp.ne.s32.totalorder %s136, %s138
      %p142 = scmp.eq.s32.totalorder %s18, 0
      %p143 = por %p141, %p142
      %p144 = scmp.ne.s32.totalorder %s136, %s138
      %p145 = scmp.eq.s32.totalorder %s23, 1
      %p146 = por %p144, %p145
      %p147 = scmp.ne.s32.totalorder %s138, %s139
      %p148 = scmp.eq.s32.totalorder %s23, 0
      %p149 = por %p147, %p148
      %p150 = scmp.ne.s32.totalorder %s138, %s139
      %p151 = scmp.eq.s32.totalorder %s24, 1
      %p152 = por %p150, %p151
      %p154 = scmp.ne.s32.totalorder %s139, %s153
      %p155 = scmp.eq.s32.totalorder %s24, 0
      %p156 = por %p154, %p155
      %s158 = sadd.s32 %s157, 1
      %p161 = scmp.eq.s32.totalorder %s18, 1
      %p162 = scmp.ne.s32.totalorder %s157, %s159
      %p163 = scmp.eq.s32.totalorder %s18, 0
      %p164 = por %p162, %p163
      %p165 = scmp.ne.s32.totalorder %s157, %s159
      %p166 = scmp.eq.s32.totalorder %s23, 1
      %p167 = por %p165, %p166
      %p168 = scmp.ne.s32.totalorder %s159, %s160
      %p169 = scmp.eq.s32.totalorder %s23, 0
      %p170 = por %p168, %p169
      %p171 = scmp.ne.s32.totalorder %s159, %s160
      %p172 = scmp.eq.s32.totalorder %s24, 1
      %p173 = por %p171, %p172
      %p175 = scmp.ne.s32.totalorder %s160, %s174
      %p176 = scmp.eq.s32.totalorder %s24, 0
      %p177 = por %p175, %p176
      %s178 = ssub.s32 %s18, %s25
      %p179 = scmp.eq.s32.totalorder %s178, 0
      %s181 = sadd.s32 %s180, 1
      %s182 = scalar_select %p179, %s180, %s181
      %p185 = pneg %p179
      %p186 = scmp.eq.s32.totalorder %s18, 1
      %p187 = por %p185, %p186
      %p188 = scmp.ne.s32.totalorder %s180, %s183
      %p189 = scmp.eq.s32.totalorder %s18, 0
      %p190 = por %p188, %p189
      %p191 = scmp.ne.s32.totalorder %s180, %s183
      %p192 = scmp.eq.s32.totalorder %s23, 1
      %p193 = por %p191, %p192
      %p194 = scmp.ne.s32.totalorder %s183, %s184
      %p195 = scmp.eq.s32.totalorder %s23, 0
      %p196 = por %p194, %p195
      %p197 = scmp.ne.s32.totalorder %s183, %s184
      %p198 = scmp.eq.s32.totalorder %s24, 1
      %p199 = por %p197, %p198
      %p201 = scmp.ne.s32.totalorder %s184, %s200
      %p202 = scmp.eq.s32.totalorder %s24, 0
      %p203 = por %p201, %p202
      %p204 = scmp.le.s32.totalorder 1, %s18
      %p205 = scmp.lt.s32.totalorder %s18, 3
      %p206 = pnand %p204, %p205
      %p207 = pneg %p206
      // Predicated region
      $region9: #{tpu_custom_call.1} parent=5 // pred_check
        _
      $region10: #{tpu_custom_call.1} parent=5 // pred_check_branch
        %209 = sbr.rel (%p206) target = $region12
      $region11: #{tpu_custom_call.1} parent=5 // pred_region
        %s210 = ssub.s32 %s18, 1
        // Predicated region
        $region13: #{tpu_custom_call.1} parent=11 // pred_check
          %p211 = pneg %p65
        $region14: #{tpu_custom_call.1} parent=11 // pred_check_branch
          %213 = sbr.rel (%p211) target = $region16
        $region15: #{tpu_custom_call.1} parent=11 // pred_region
          %s215 = ssub.s32 128, 128
          %216 = vsyncadd [#allocation3], %s215
          %s217 = sshll.u32 [#allocation2], 4
          %s218 = int_to_ptr.vmem [resolvable:$true] %s217
          %223 = dma.hbm_to_vmem [thread:$0]  %s1, 128, %s218, [#allocation3], 64, 64, 4
        $region16: #{tpu_custom_call.1} parent=11 // pred_fallthru
          _
        // Predicated region
        $region17: #{tpu_custom_call.1} parent=11 // pred_check
          %p224 = pneg %p86
        $region18: #{tpu_custom_call.1} parent=11 // pred_check_branch
          %226 = sbr.rel (%p224) target = $region20
        $region19: #{tpu_custom_call.1} parent=11 // pred_region
          _
        $region20: #{tpu_custom_call.1} parent=11 // pred_fallthru
          _
        // Predicated region
        $region21: #{tpu_custom_call.1} parent=11 // pred_check
          %p227 = pneg %p107
        $region22: #{tpu_custom_call.1} parent=11 // pred_check_branch
          %229 = sbr.rel (%p227) target = $region24
        $region23: #{tpu_custom_call.1} parent=11 // pred_region
          _
        $region24: #{tpu_custom_call.1} parent=11 // pred_fallthru
          _
        // Predicated region
        $region25: #{tpu_custom_call.1} parent=11 // pred_check
          %p230 = pneg %p128
        $region26: #{tpu_custom_call.1} parent=11 // pred_check_branch
          %232 = sbr.rel (%p230) target = $region28
        $region27: #{tpu_custom_call.1} parent=11 // pred_region
          %s234 = ssub.s32 64, 64
          %235 = vsyncadd [#allocation6], %s234
          %s237 = sshll.u32 [#allocation5], 4
          %s238 = int_to_ptr.vmem [resolvable:$true] %s237
          %240 = dma.hbm_to_vmem [thread:$0]  %s4, 64, %s238, [#allocation6]
        $region28: #{tpu_custom_call.1} parent=11 // pred_fallthru
          _
        // Predicated region
        $region29: #{tpu_custom_call.1} parent=11 // pred_check
          %p241 = pneg %p149
        $region30: #{tpu_custom_call.1} parent=11 // pred_check_branch
          %243 = sbr.rel (%p241) target = $region32
        $region31: #{tpu_custom_call.1} parent=11 // pred_region
          %s245 = ssub.s32 1024, 1024
          %246 = vsyncadd [#allocation6], %s245
          %s247 = sshll.u32 [#allocation7], 4
          %s248 = int_to_ptr.vmem [resolvable:$true] %s247
          %253 = dma.hbm_to_vmem [thread:$0]  %s5, 1024, %s248, [#allocation6], 64, 64, 4
        $region32: #{tpu_custom_call.1} parent=11 // pred_fallthru
          _
        // Predicated region
        $region33: #{tpu_custom_call.1} parent=11 // pred_check
          %p254 = pneg %p170
        $region34: #{tpu_custom_call.1} parent=11 // pred_check_branch
          %256 = sbr.rel (%p254) target = $region36
        $region35: #{tpu_custom_call.1} parent=11 // pred_region
          _
        $region36: #{tpu_custom_call.1} parent=11 // pred_fallthru
          _
      $region12: #{tpu_custom_call.1} parent=5 // pred_fallthru
        _
      %p257 = scmp.lt.s32.totalorder %s18, 2
      // Predicated region
      $region37: #{tpu_custom_call.1} parent=5 // pred_check
        %p258 = pneg %p257
      $region38: #{tpu_custom_call.1} parent=5 // pred_check_branch
        %260 = sbr.rel (%p258) target = $region40
      $region39: #{tpu_custom_call.1} parent=5 // pred_region
        // Predicated region
        $region41: #{tpu_custom_call.1} parent=39 // pred_check
          %p261 = pneg %p38
        $region42: #{tpu_custom_call.1} parent=39 // pred_check_branch
          %263 = sbr.rel (%p261) target = $region44
        $region43: #{tpu_custom_call.1} parent=39 // pred_region
          %s264 = smul.u32 3, %s18
          %p265 = scmp.lt.s32.totalorder %s264, 5
          %s266 = scalar_select %p265, %s264, 5
          %s267 = smul.addr %s266, 8
          %s268 = scalar_lea.vmem %s0, %s267
          %s269 = smul.u32 3, %s18
        $region44: #{tpu_custom_call.1} parent=39 // pred_fallthru
          _
      $region40: #{tpu_custom_call.1} parent=5 // pred_fallthru
        _
      %p270 = scmp.le.s32.totalorder 1, %s18
      %p271 = scmp.lt.s32.totalorder %s18, 3
      %p272 = pnand %p270, %p271
      %p273 = pneg %p272
      // Predicated region
      $region45: #{tpu_custom_call.1} parent=5 // pred_check
        _
      $region46: #{tpu_custom_call.1} parent=5 // pred_check_branch
        %275 = sbr.rel (%p272) target = $region48
      $region47: #{tpu_custom_call.1} parent=5 // pred_region
        %s276 = ssub.s32 %s18, 1
        // Predicated region
        $region49: #{tpu_custom_call.1} parent=47 // pred_check
          %p277 = pneg %p65
        $region50: #{tpu_custom_call.1} parent=47 // pred_check_branch
          %279 = sbr.rel (%p277) target = $region52
        $region51: #{tpu_custom_call.1} parent=47 // pred_region
          %280 = dma.done [#allocation3], 128
        $region52: #{tpu_custom_call.1} parent=47 // pred_fallthru
          _
        // Predicated region
        $region53: #{tpu_custom_call.1} parent=47 // pred_check
          %p281 = pneg %p128
        $region54: #{tpu_custom_call.1} parent=47 // pred_check_branch
          %283 = sbr.rel (%p281) target = $region56
        $region55: #{tpu_custom_call.1} parent=47 // pred_region
          %284 = dma.done [#allocation6], 64
        $region56: #{tpu_custom_call.1} parent=47 // pred_fallthru
          _
        // Predicated region
        $region57: #{tpu_custom_call.1} parent=47 // pred_check
          %p285 = pneg %p149
        $region58: #{tpu_custom_call.1} parent=47 // pred_check_branch
          %287 = sbr.rel (%p285) target = $region60
        $region59: #{tpu_custom_call.1} parent=47 // pred_region
          %288 = dma.done [#allocation6], 1024
        $region60: #{tpu_custom_call.1} parent=47 // pred_fallthru
          _
        %s289 = smul.u32 3, %s23
        %p290 = scmp.lt.s32.totalorder %s289, 5
        %s291 = scalar_select %p290, %s289, 5
        %s292 = smul.addr %s291, 8
        %s293 = scalar_lea.vmem %s0, %s292
        %p294 = pneg %p44
        %p295 = pneg %p41
        %p296 = pneg %p65
        %p297 = pneg %p62
        %p298 = pneg %p86
        %p299 = pneg %p83
        %p300 = pneg %p107
        %p301 = pneg %p104
        %p302 = pneg %p128
        %p303 = pneg %p125
        %p304 = pneg %p149
        %p305 = pneg %p146
        %p306 = pneg %p170
        %p307 = pneg %p167
        %p308 = pneg %p196
        %p309 = pneg %p193
        %s310 = sand.u32 %s183, 1
        %s311 = scalar_lea.sflag [#allocation4], %s310
        %s312 = sand.u32 %s183, 1
        %s313 = smul.addr %s312, 24
        %s314 = scalar_lea.vmem [#allocation8], %s313
        %s315 = smul.u32 3, %s23
        %p316 = scmp.lt.s32.totalorder %s315, 5
        %s317 = scalar_select %p316, %s315, 5
        %s318 = smul.addr %s317, 8
        %s319 = scalar_lea.vmem %s0, %s318
        %s320 = smul.u32 3, %s23
        %s321 = smul.u32 3, %s23
        %v323 = vld [vmem:[%s319] sm:$0xff]
        %v324 = vld [vmem:[%s319 + $0x8] sm:$0xff]
        %v325 = vld [vmem:[%s319 + $0x10] sm:$0xff]
        %vm326 = vcmp.ne.f32.partialorder %v323, %v323
        %vm327 = vcmp.ne.f32.partialorder %v324, %v324
        %vm328 = vcmp.ne.f32.partialorder %v325, %v325
        %v329 = vmax.f32 %v323, -3.3895314e+38
        %v330 = vmax.f32 %v324, -3.3895314e+38
        %v331 = vmax.f32 %v325, -3.3895314e+38
        %v332 = vmin.f32 %v329, 3.3895314e+38
        %v333 = vmin.f32 %v330, 3.3895314e+38
        %v334 = vmin.f32 %v331, 3.3895314e+38
        %v335 = vsel %vm326, 0.0, %v332
        %v336 = vsel %vm327, 0.0, %v333
        %v337 = vsel %vm328, 0.0, %v334
        %v338 = vpack.c.bf16 %v336, %v335
        %v339 = vpack.c.bf16 %v337, %v337
        %v340 = vld [vmem:[#allocation2] sm:$0xf]
        %v341 = vld [vmem:[#allocation2 + $0x4] sm:$0xf]
        %v342 = vld [vmem:[%s2] sm:$0x7]
        %v343 = vlaneseq
        %v344 = vshrl.u32 %v343, 7
        %v345 = vsub.s32 0, %v344
        %v346 = vrot.slane %v342, %v345
        %v349 = vunpack.c.l.b16 %v340
        %v350 = vunpack.c.l.b16 %v341
        %v351 = vpack.c.b16 %v350, %v349
        %vm353 = vcmask 130048
        %v355 = vsel %vm353, %v338, 0
        %v358 = vsel %vm353, %v339, 0
        %360 = vmatprep.subr.bf16.mxu0 0
        %361 = vmatpush1.bf16.msra.mxu0 0
        %362 = vmatprep.subr.bf16.mxu0 0
        %363 = vmatpush1.bf16.msra.mxu0 0
        %364 = vmatprep.subr.bf16.mxu0 0
        %365 = vmatpush1.bf16.msra.mxu0 0
        %366 = vmatprep.subr.bf16.mxu0 0
        %367 = vmatpush1.bf16.msra.mxu0 0
        %368 = vmatprep.subr.bf16.mxu0 0
        %369 = vmatpush1.bf16.msra.mxu0 0
        %370 = vmatprep.subr.bf16.mxu0 0
        %371 = vmatpush1.bf16.msra.mxu0 0
        %372 = vmatprep.subr.bf16.mxu0 0
        %373 = vmatpush1.bf16.msra.mxu0 0
        %374 = vmatprep.subr.bf16.mxu0 0
        %375 = vmatpush1.bf16.msra.mxu0 %v351
        %376 = vmatprep.subr.bf16.mxu0 0
        %377 = vmatpush2.bf16.msra.mxu0 0
        %378 = vmatprep.subr.bf16.mxu0 0
        %379 = vmatpush2.bf16.msra.mxu0 0
        %380 = vmatprep.subr.bf16.mxu0 0
        %381 = vmatpush2.bf16.msra.mxu0 0
        %382 = vmatprep.subr.bf16.mxu0 0
        %383 = vmatpush2.bf16.msra.mxu0 0
        %384 = vmatprep.subr.bf16.mxu0 0
        %385 = vmatpush2.bf16.msra.mxu0 0
        %386 = vmatprep.subr.bf16.mxu0 0
        %387 = vmatpush2.bf16.msra.mxu0 0
        %388 = vmatprep.subr.bf16.mxu0 0
        %389 = vmatpush2.bf16.msra.mxu0 0
        %390 = vmatprep.subr.bf16.mxu0 0
        %391 = vmatpush2.bf16.msra.mxu0 0
        %392 = vmatprep.mubr.bf16.mxu0 0
        %393 = vmatmul.mubr.bf16.gmra.mxu0 %v355
        %v394 = vpop.f32.mrf.mxu0
        %v395 = vadd.f32 %v346, %v394
        %v396 = vpop.f32.mrf.mxu0
        %v397 = vpop.f32.mrf.mxu0
        %v398 = vadd.f32 %v346, %v397
        %v399 = vpop.f32.mrf.mxu0
        %400 = vmatprep.mubr.bf16.mxu0 0
        %401 = vmatmul.mubr.bf16.gmra.mxu0 %v358
        %v402 = vpop.f32.mrf.mxu0
        %v403 = vadd.f32 %v346, %v402
        %v404 = vpop.f32.mrf.mxu0
        %v405 = vpop.f32.mrf.mxu0
        %v406 = vpop.f32.mrf.mxu0
        %407 = vdwg.mxu0
        %v408 = vmax.f32 %v395, 0.0
        %v409 = vmax.f32 %v398, 0.0
        %v410 = vmax.f32 %v403, 0.0
        %411 = vadd.xlane.f32.xlu0 %v408
        %v412 = vpop.xlane.xlu0 %411
        %413 = vadd.xlane.f32.xlu0 %v409
        %v414 = vpop.xlane.xlu0 %413
        %415 = vadd.xlane.f32.xlu0 %v410
        %v416 = vpop.xlane.xlu0 %415
        %v417 = vmul.f32 %v408, %v408
        %v418 = vmul.f32 %v409, %v409
        %v419 = vmul.f32 %v410, %v410
        %420 = vadd.xlane.f32.xlu0 %v417
        %v421 = vpop.xlane.xlu0 %420
        %422 = vadd.xlane.f32.xlu0 %v418
        %v423 = vpop.xlane.xlu0 %422
        %424 = vadd.xlane.f32.xlu0 %v419
        %v425 = vpop.xlane.xlu0 %424
        %v426 = vmul.f32 %v412, 0.03125
        %v427 = vmul.f32 %v414, 0.03125
        %v428 = vmul.f32 %v416, 0.03125
        %v429 = vmul.f32 %v421, 0.03125
        %v430 = vmul.f32 %v423, 0.03125
        %v431 = vmul.f32 %v425, 0.03125
        %v432 = vmul.f32 %v426, %v426
        %v433 = vmul.f32 %v427, %v427
        %v434 = vmul.f32 %v428, %v428
        %v435 = vsub.f32 %v429, %v432
        %v436 = vsub.f32 %v430, %v433
        %v437 = vsub.f32 %v431, %v434
        %v438 = vmax.f32 %v435, 0.0
        %v439 = vmax.f32 %v436, 0.0
        %v440 = vmax.f32 %v437, 0.0
        %v441 = vadd.f32 %v438, 1e-05
        %v442 = vadd.f32 %v439, 1e-05
        %v443 = vadd.f32 %v440, 1e-05
        %v444 = vrsqrt.pop %v441
        %v445 = vrsqrt.pop %v442
        %v446 = vrsqrt.pop %v443
        %v447 = vsub.f32 %v408, %v426
        %v448 = vsub.f32 %v409, %v427
        %v449 = vsub.f32 %v410, %v428
        %v450 = vmul.f32 %v447, %v444
        %v451 = vmul.f32 %v448, %v445
        %v452 = vmul.f32 %v449, %v446
        %v453 = vpack.c.bf16 %v451, %v450
        %v454 = vpack.c.bf16 %v452, %v452
        %v455 = vpack.c.bf16 %v342, %v342
        %v457 = vshrl.u32 %v455, 16
        %v458 = vpack.i.b16 %v457, %v457
        %v460 = vlaneseq
        %v461 = vshrl.u32 %v460, 7
        %v462 = vsub.s32 0, %v461
        %v463 = vrot.slane %v458, %v462
        %v464 = vmul.bf16 %v453, %v463
        %v465 = vmul.bf16 %v454, %v463
        %v466 = vpack.i.b16 %v455, %v455
        %v468 = vlaneseq
        %v469 = vshrl.u32 %v468, 7
        %v470 = vsub.s32 1, %v469
        %v471 = vrot.slane %v466, %v470
        %v472 = vadd.bf16 %v464, %v471
        %v473 = vadd.bf16 %v465, %v471
        %v474 = vld [vmem:[%s3] sm:$0xf]
        %v475 = vld [vmem:[%s3 + $0x4] sm:$0xf]
        %v476 = vld [vmem:[%s3 + $0x8] sm:$0xf]
        %v477 = vld [vmem:[%s3 + $0xc] sm:$0xf]
        %v478 = vld [vmem:[%s3 + $0x10] sm:$0xf]
        %v479 = vld [vmem:[%s3 + $0x14] sm:$0xf]
        %v480 = vld [vmem:[%s3 + $0x18] sm:$0xf]
        %v481 = vld [vmem:[%s3 + $0x1c] sm:$0xf]
        %v482 = vld [vmem:[%s3 + $0x20] sm:$0xf]
        %v483 = vld [vmem:[%s3 + $0x24] sm:$0xf]
        %v484 = vld [vmem:[%s3 + $0x28] sm:$0xf]
        %v485 = vld [vmem:[%s3 + $0x2c] sm:$0xf]
        %v486 = vld [vmem:[%s3 + $0x30] sm:$0xf]
        %v487 = vld [vmem:[%s3 + $0x34] sm:$0xf]
        %v488 = vld [vmem:[%s3 + $0x38] sm:$0xf]
        %v489 = vld [vmem:[%s3 + $0x3c] sm:$0xf]
        %v490 = vld [vmem:[#allocation5] sm:$0x7]
        %v491 = vlaneseq
        %v492 = vshrl.u32 %v491, 7
        %v493 = vsub.s32 0, %v492
        %v494 = vrot.slane %v490, %v493
        %v511 = vunpack.c.l.b16 %v474
        %v512 = vunpack.c.l.b16 %v475
        %v513 = vunpack.c.l.b16 %v476
        %v514 = vunpack.c.l.b16 %v477
        %v515 = vunpack.c.l.b16 %v478
        %v516 = vunpack.c.l.b16 %v479
        %v517 = vunpack.c.l.b16 %v480
        %v518 = vunpack.c.l.b16 %v481
        %v519 = vunpack.c.l.b16 %v482
        %v520 = vunpack.c.l.b16 %v483
        %v521 = vunpack.c.l.b16 %v484
        %v522 = vunpack.c.l.b16 %v485
        %v523 = vunpack.c.l.b16 %v486
        %v524 = vunpack.c.l.b16 %v487
        %v525 = vunpack.c.l.b16 %v488
        %v526 = vunpack.c.l.b16 %v489
        %v527 = vpack.c.b16 %v512, %v511
        %v528 = vpack.c.b16 %v514, %v513
        %v529 = vpack.c.b16 %v516, %v515
        %v530 = vpack.c.b16 %v518, %v517
        %v531 = vpack.c.b16 %v520, %v519
        %v532 = vpack.c.b16 %v522, %v521
        %v533 = vpack.c.b16 %v524, %v523
        %v534 = vpack.c.b16 %v526, %v525
        %543 = vmatprep.subr.bf16.mxu0 0
        %544 = vmatpush1.bf16.msra.mxu0 %v534
        %545 = vmatprep.subr.bf16.mxu0 0
        %546 = vmatpush1.bf16.msra.mxu0 %v533
        %547 = vmatprep.subr.bf16.mxu0 0
        %548 = vmatpush1.bf16.msra.mxu0 %v532
        %549 = vmatprep.subr.bf16.mxu0 0
        %550 = vmatpush1.bf16.msra.mxu0 %v531
        %551 = vmatprep.subr.bf16.mxu0 0
        %552 = vmatpush1.bf16.msra.mxu0 %v530
        %553 = vmatprep.subr.bf16.mxu0 0
        %554 = vmatpush1.bf16.msra.mxu0 %v529
        %555 = vmatprep.subr.bf16.mxu0 0
        %556 = vmatpush1.bf16.msra.mxu0 %v528
        %557 = vmatprep.subr.bf16.mxu0 0
        %558 = vmatpush1.bf16.msra.mxu0 %v527
        %559 = vmatprep.subr.bf16.mxu0 0
        %560 = vmatpush2.bf16.msra.mxu0 0
        %561 = vmatprep.subr.bf16.mxu0 0
        %562 = vmatpush2.bf16.msra.mxu0 0
        %563 = vmatprep.subr.bf16.mxu0 0
        %564 = vmatpush2.bf16.msra.mxu0 0
        %565 = vmatprep.subr.bf16.mxu0 0
        %566 = vmatpush2.bf16.msra.mxu0 0
        %567 = vmatprep.subr.bf16.mxu0 0
        %568 = vmatpush2.bf16.msra.mxu0 0
        %569 = vmatprep.subr.bf16.mxu0 0
        %570 = vmatpush2.bf16.msra.mxu0 0
        %571 = vmatprep.subr.bf16.mxu0 0
        %572 = vmatpush2.bf16.msra.mxu0 0
        %573 = vmatprep.subr.bf16.mxu0 0
        %574 = vmatpush2.bf16.msra.mxu0 0
        %575 = vmatprep.mubr.bf16.mxu0 0
        %576 = vmatmul.mubr.bf16.gmra.mxu0 %v472
        %v577 = vpop.f32.mrf.mxu0
        %v578 = vadd.f32 %v494, %v577
        %v579 = vpop.f32.mrf.mxu0
        %v580 = vpop.f32.mrf.mxu0
        %v581 = vadd.f32 %v494, %v580
        %v582 = vpop.f32.mrf.mxu0
        %583 = vmatprep.mubr.bf16.mxu0 0
        %584 = vmatmul.mubr.bf16.gmra.mxu0 %v473
        %v585 = vpop.f32.mrf.mxu0
        %v586 = vadd.f32 %v494, %v585
        %v587 = vpop.f32.mrf.mxu0
        %v588 = vpop.f32.mrf.mxu0
        %v589 = vpop.f32.mrf.mxu0
        %590 = vdwg.mxu0
        %v591 = vmax.f32 %v578, 0.0
        %v592 = vmax.f32 %v581, 0.0
        %v593 = vmax.f32 %v586, 0.0
        %594 = vadd.xlane.f32.xlu0 %v591
        %v595 = vpop.xlane.xlu0 %594
        %596 = vadd.xlane.f32.xlu0 %v592
        %v597 = vpop.xlane.xlu0 %596
        %598 = vadd.xlane.f32.xlu0 %v593
        %v599 = vpop.xlane.xlu0 %598
        %v600 = vmul.f32 %v591, %v591
        %v601 = vmul.f32 %v592, %v592
        %v602 = vmul.f32 %v593, %v593
        %603 = vadd.xlane.f32.xlu0 %v600
        %v604 = vpop.xlane.xlu0 %603
        %605 = vadd.xlane.f32.xlu0 %v601
        %v606 = vpop.xlane.xlu0 %605
        %607 = vadd.xlane.f32.xlu0 %v602
        %v608 = vpop.xlane.xlu0 %607
        %v609 = vmul.f32 %v595, 0.03125
        %v610 = vmul.f32 %v597, 0.03125
        %v611 = vmul.f32 %v599, 0.03125
        %v612 = vmul.f32 %v604, 0.03125
        %v613 = vmul.f32 %v606, 0.03125
        %v614 = vmul.f32 %v608, 0.03125
        %v615 = vmul.f32 %v609, %v609
        %v616 = vmul.f32 %v610, %v610
        %v617 = vmul.f32 %v611, %v611
        %v618 = vsub.f32 %v612, %v615
        %v619 = vsub.f32 %v613, %v616
        %v620 = vsub.f32 %v614, %v617
        %v621 = vmax.f32 %v618, 0.0
        %v622 = vmax.f32 %v619, 0.0
        %v623 = vmax.f32 %v620, 0.0
        %v624 = vadd.f32 %v621, 1e-05
        %v625 = vadd.f32 %v622, 1e-05
        %v626 = vadd.f32 %v623, 1e-05
        %v627 = vrsqrt.pop %v624
        %v628 = vrsqrt.pop %v625
        %v629 = vrsqrt.pop %v626
        %v630 = vsub.f32 %v591, %v609
        %v631 = vsub.f32 %v592, %v610
        %v632 = vsub.f32 %v593, %v611
        %v633 = vmul.f32 %v630, %v627
        %v634 = vmul.f32 %v631, %v628
        %v635 = vmul.f32 %v632, %v629
        %v636 = vpack.c.bf16 %v634, %v633
        %v637 = vpack.c.bf16 %v635, %v635
        %v638 = vpack.c.bf16 %v490, %v490
        %v640 = vshrl.u32 %v638, 16
        %v641 = vpack.i.b16 %v640, %v640
        %v643 = vlaneseq
        %v644 = vshrl.u32 %v643, 7
        %v645 = vsub.s32 0, %v644
        %v646 = vrot.slane %v641, %v645
        %v647 = vmul.bf16 %v636, %v646
        %v648 = vmul.bf16 %v637, %v646
        %v649 = vpack.i.b16 %v638, %v638
        %v651 = vlaneseq
        %v652 = vshrl.u32 %v651, 7
        %v653 = vsub.s32 1, %v652
        %v654 = vrot.slane %v649, %v653
        %v655 = vadd.bf16 %v647, %v654
        %v656 = vadd.bf16 %v648, %v654
        %v657 = vld [vmem:[#allocation7] sm:$0xf]
        %v658 = vld [vmem:[#allocation7 + $0x4] sm:$0xf]
        %v659 = vld [vmem:[#allocation7 + $0x8] sm:$0xf]
        %v660 = vld [vmem:[#allocation7 + $0xc] sm:$0xf]
        %v661 = vld [vmem:[#allocation7 + $0x10] sm:$0xf]
        %v662 = vld [vmem:[#allocation7 + $0x14] sm:$0xf]
        %v663 = vld [vmem:[#allocation7 + $0x18] sm:$0xf]
        %v664 = vld [vmem:[#allocation7 + $0x1c] sm:$0xf]
        %v665 = vld [vmem:[#allocation7 + $0x20] sm:$0xf]
        %v666 = vld [vmem:[#allocation7 + $0x24] sm:$0xf]
        %v667 = vld [vmem:[#allocation7 + $0x28] sm:$0xf]
        %v668 = vld [vmem:[#allocation7 + $0x2c] sm:$0xf]
        %v669 = vld [vmem:[#allocation7 + $0x30] sm:$0xf]
        %v670 = vld [vmem:[#allocation7 + $0x34] sm:$0xf]
        %v671 = vld [vmem:[#allocation7 + $0x38] sm:$0xf]
        %v672 = vld [vmem:[#allocation7 + $0x3c] sm:$0xf]
        %v673 = vld [vmem:[%s6] sm:$0x1]
        %v675 = vlaneseq
        %v676 = vshrl.u32 %v675, 7
        %v677 = vsub.s32 0, %v676
        %v678 = vrot.slane %v673, %v677
        %v696 = vunpack.c.l.b16 %v657
        %v697 = vunpack.c.l.b16 %v658
        %v698 = vunpack.c.l.b16 %v659
        %v699 = vunpack.c.l.b16 %v660
        %v700 = vunpack.c.l.b16 %v661
        %v701 = vunpack.c.l.b16 %v662
        %v702 = vunpack.c.l.b16 %v663
        %v703 = vunpack.c.l.b16 %v664
        %v704 = vunpack.c.l.b16 %v665
        %v705 = vunpack.c.l.b16 %v666
        %v706 = vunpack.c.l.b16 %v667
        %v707 = vunpack.c.l.b16 %v668
        %v708 = vunpack.c.l.b16 %v669
        %v709 = vunpack.c.l.b16 %v670
        %v710 = vunpack.c.l.b16 %v671
        %v711 = vunpack.c.l.b16 %v672
        %v712 = vpack.c.b16 %v697, %v696
        %v713 = vpack.c.b16 %v699, %v698
        %v714 = vpack.c.b16 %v701, %v700
        %v715 = vpack.c.b16 %v703, %v702
        %v716 = vpack.c.b16 %v705, %v704
        %v717 = vpack.c.b16 %v707, %v706
        %v718 = vpack.c.b16 %v709, %v708
        %v719 = vpack.c.b16 %v711, %v710
        %728 = vmatprep.subr.bf16.mxu0 0
        %729 = vmatpush1.bf16.msra.mxu0 %v719
        %730 = vmatprep.subr.bf16.mxu0 0
        %731 = vmatpush1.bf16.msra.mxu0 %v718
        %732 = vmatprep.subr.bf16.mxu0 0
        %733 = vmatpush1.bf16.msra.mxu0 %v717
        %734 = vmatprep.subr.bf16.mxu0 0
        %735 = vmatpush1.bf16.msra.mxu0 %v716
        %736 = vmatprep.subr.bf16.mxu0 0
        %737 = vmatpush1.bf16.msra.mxu0 %v715
        %738 = vmatprep.subr.bf16.mxu0 0
        %739 = vmatpush1.bf16.msra.mxu0 %v714
        %740 = vmatprep.subr.bf16.mxu0 0
        %741 = vmatpush1.bf16.msra.mxu0 %v713
        %742 = vmatprep.subr.bf16.mxu0 0
        %743 = vmatpush1.bf16.msra.mxu0 %v712
        %744 = vmatprep.subr.bf16.mxu0 0
        %745 = vmatpush2.bf16.msra.mxu0 0
        %746 = vmatprep.subr.bf16.mxu0 0
        %747 = vmatpush2.bf16.msra.mxu0 0
        %748 = vmatprep.subr.bf16.mxu0 0
        %749 = vmatpush2.bf16.msra.mxu0 0
        %750 = vmatprep.subr.bf16.mxu0 0
        %751 = vmatpush2.bf16.msra.mxu0 0
        %752 = vmatprep.subr.bf16.mxu0 0
        %753 = vmatpush2.bf16.msra.mxu0 0
        %754 = vmatprep.subr.bf16.mxu0 0
        %755 = vmatpush2.bf16.msra.mxu0 0
        %756 = vmatprep.subr.bf16.mxu0 0
        %757 = vmatpush2.bf16.msra.mxu0 0
        %758 = vmatprep.subr.bf16.mxu0 0
        %759 = vmatpush2.bf16.msra.mxu0 0
        %760 = vmatprep.mubr.bf16.mxu0 0
        %761 = vmatmul.mubr.bf16.gmra.mxu0 %v655
        %v762 = vpop.f32.mrf.mxu0
        %v763 = vadd.f32 %v678, %v762
        %v764 = vpop.f32.mrf.mxu0
        %v765 = vpop.f32.mrf.mxu0
        %v766 = vadd.f32 %v678, %v765
        %v767 = vpop.f32.mrf.mxu0
        %768 = vmatprep.mubr.bf16.mxu0 0
        %769 = vmatmul.mubr.bf16.gmra.mxu0 %v656
        %v770 = vpop.f32.mrf.mxu0
        %v771 = vadd.f32 %v678, %v770
        %v772 = vpop.f32.mrf.mxu0
        %v773 = vpop.f32.mrf.mxu0
        %v774 = vpop.f32.mrf.mxu0
        %775 = vdwg.mxu0
        %776 = vst [vmem:[%s314] sm:$0xff] %v763
        %777 = vst [vmem:[%s314 + $0x8] sm:$0xff] %v766
        %778 = vst [vmem:[%s314 + $0x10] sm:$0xff] %v771
        %s779 = sand.u32 %s183, 1
        %s780 = scalar_lea.sflag [#allocation4], %s779
        %s781 = sand.u32 %s183, 1
        %s782 = smul.addr %s781, 24
        %s783 = scalar_lea.vmem [#allocation8], %s782
        // Predicated region
        $region61: #{tpu_custom_call.1} parent=47 // pred_check
          %p784 = pneg %p193
        $region62: #{tpu_custom_call.1} parent=47 // pred_check_branch
          %786 = sbr.rel (%p784) target = $region64
        $region63: #{tpu_custom_call.1} parent=47 // pred_region
          %s787 = smul.u32 3, %s23
          %s789 = ssub.s32 384, 384
          %790 = vsyncadd %s780, %s789
          %s791 = smul.addr %s787, 128
          %s792 = scalar_lea.hbm %s7, %s791
          %s793 = sshll.u32 %s783, 4
          %s794 = int_to_ptr.vmem [resolvable:$true] %s793
          %799 = dma.vmem_to_hbm [thread:$0]  %s794, 384, %s792, %s780, 128, 128, 8
        $region64: #{tpu_custom_call.1} parent=47 // pred_fallthru
          _
      $region48: #{tpu_custom_call.1} parent=5 // pred_fallthru
        _
      %p800 = scmp.le.s32.totalorder 2, %s18
      // Predicated region
      $region65: #{tpu_custom_call.1} parent=5 // pred_check
        %p801 = pneg %p800
      $region66: #{tpu_custom_call.1} parent=5 // pred_check_branch
        %803 = sbr.rel (%p801) target = $region68
      $region67: #{tpu_custom_call.1} parent=5 // pred_region
        %s804 = ssub.s32 %s18, 2
        // Predicated region
        $region69: #{tpu_custom_call.1} parent=67 // pred_check
          %p805 = pneg %p199
        $region70: #{tpu_custom_call.1} parent=67 // pred_check_branch
          %807 = sbr.rel (%p805) target = $region72
        $region71: #{tpu_custom_call.1} parent=67 // pred_region
          %s808 = sand.u32 %s184, 1
          %s809 = scalar_lea.sflag [#allocation4], %s808
          %s810 = sand.u32 %s184, 1
          %s811 = smul.addr %s810, 24
          %s812 = scalar_lea.vmem [#allocation8], %s811
          %813 = dma.done %s809, 384
        $region72: #{tpu_custom_call.1} parent=67 // pred_fallthru
          _
      $region68: #{tpu_custom_call.1} parent=5 // pred_fallthru
        _
    $region6: #{tpu_custom_call.1} parent=1 // loop_footer
      %s22 = sadd.s32 1, %s18
    $region7: #{tpu_custom_call.1} parent=1 // loop_footer_branch
      %17 = sbr.rel target = $region3
    $region8: #{tpu_custom_call.1} parent=1 // loop_exit
      _
    %814 = vsyncpa [#allocation3], 1
    %s815 = scalar_lea.sflag [#allocation3], 1
    %816 = vsyncpa %s815, 1
    %817 = vsyncpa [#allocation6], 1
    %818 = vsyncpa [#allocation4], 1
    %s819 = scalar_lea.sflag [#allocation4], 1
    %820 = vsyncpa %s819, 1

// kernel: tpu_custom_call.1
$region0: #{tpu_custom_call.1}
  #allocation0 [shape = 'u32[]', space=smem, size = 0x4, offset = 0x4, fixed_abs, tag = 'smem constant byte address 0x4 - core index']
  #allocation1 [shape = 'u32[144,128]{1,0:T(1,128)}', space=vmem, size = 0x12000, scoped, tag = 'internal scratch']
  %s0 = inlined_call_operand.vmem [shape: f32[48,16], index: 0, kind: input, shape index: {}]
  %s1 = inlined_call_operand.hbm [shape: bf16[16,128], index: 1, kind: input, shape index: {}]
  %s2 = inlined_call_operand.vmem [shape: f32[3,128], index: 2, kind: input, shape index: {}]
  %s3 = inlined_call_operand.vmem [shape: bf16[128,128], index: 3, kind: input, shape index: {}]
  %s4 = inlined_call_operand.hbm [shape: f32[3,128], index: 4, kind: input, shape index: {}]
  %s5 = inlined_call_operand.hbm [shape: bf16[128,128], index: 5, kind: input, shape index: {}]
  %s6 = inlined_call_operand.vmem [shape: f32[1,128], index: 6, kind: input, shape index: {}]
  %s7 = inlined_call_operand.hbm [shape: f32[48,128], index: 7, kind: output, shape index: {}]
  %s8 = sld [smem:[#allocation0]]
  $region73: #{tpu_custom_call.1} parent=0
    _
  %s10 = ssub.s32 1, %s8
  %s11 = scalar_select 0, %s10, %s8
  $region1: #{tpu_custom_call.1} parent=0
    #allocation2 [shape = 'u8[4096]{0}', space=vmem, size = 0x1000, scoped, tag = 'input window, operand 1, single buffered']
    #allocation3 [shape = 's32[2]{0}', space=sflag, size = 0x8, scoped, tag = 'scoped memory for tpu_custom_call.1']
    #allocation4 [shape = 's32[2]{0}', space=sflag, size = 0x8, scoped, tag = 'scoped memory for tpu_custom_call.1']
    #allocation5 [shape = 'u8[2048]{0}', space=vmem, size = 0x800, scoped, tag = 'input window, operand 4, single buffered']
    #allocation6 [shape = 's32[1]{0}', space=sflag, size = 0x4, scoped, tag = 'scoped memory for tpu_custom_call.1']
    #allocation7 [shape = 'u8[32768]{0}', space=vmem, size = 0x8000, scoped, tag = 'input window, operand 5, single buffered']
    #allocation8 [shape = 'u8[24576]{0}', space=vmem, size = 0x6000, scoped, tag = 'output window, operand 0']
    %12 = vsyncpa [#allocation3], 0
    %13 = vsyncpa [#allocation6], 0
    %14 = vsyncpa [#allocation4], 0
    %s15 = scalar_lea.sflag [#allocation4], 1
    %16 = vsyncpa %s15, 0
    loop: start=0, step=1, limit=4
    $region2: #{tpu_custom_call.1} parent=1 // loop_pre_header
      _
    $region3: #{tpu_custom_call.1} parent=1 // loop_header
      %s18 = sphi 0, %s22
      %p19 = scmp.ge.s32.totalorder %s18, 4
      %s28 = sphi 0, %s30
      %s31 = sphi 0, %s28
      %s32 = sphi 0, %s31
      %s48 = sphi 0, %s32
      %s52 = sphi 0, %s52
      %s54 = sphi 0, %s52
      %s55 = sphi 0, %s54
      %s69 = sphi 0, %s55
      %s73 = sphi 0, %s73
      %s75 = sphi 0, %s73
      %s76 = sphi 0, %s75
      %s90 = sphi 0, %s76
      %s94 = sphi 0, %s94
      %s96 = sphi 0, %s94
      %s97 = sphi 0, %s96
      %s111 = sphi 0, %s97
      %s115 = sphi 0, %s115
      %s117 = sphi 0, %s115
      %s118 = sphi 0, %s117
      %s132 = sphi 0, %s118
      %s136 = sphi 0, %s136
      %s138 = sphi 0, %s136
      %s139 = sphi 0, %s138
      %s153 = sphi 0, %s139
      %s157 = sphi 0, %s157
      %s159 = sphi 0, %s157
      %s160 = sphi 0, %s159
      %s174 = sphi 0, %s160
      %s180 = sphi 0, %s182
      %s183 = sphi 0, %s180
      %s184 = sphi 0, %s183
      %s200 = sphi 0, %s184
    $region4: #{tpu_custom_call.1} parent=1 // loop_header_branch
      %21 = sbr.rel (%p19) target = $region8
    $region5: #{tpu_custom_call.1} parent=1 // loop_body
      %s23 = ssub.s32 %s18, 1
      %s24 = ssub.s32 %s18, 2
      %s25 = sadd.s32 %s18, 1
      %s26 = ssub.s32 %s18, %s25
      %p27 = scmp.eq.s32.totalorder %s26, 0
      %s29 = sadd.s32 %s28, 1
      %s30 = scalar_select %p27, %s28, %s29
      %p33 = pneg %p27
      %p34 = scmp.eq.s32.totalorder %s18, 1
      %p35 = por %p33, %p34
      %p36 = scmp.ne.s32.totalorder %s28, %s31
      %p37 = scmp.eq.s32.totalorder %s18, 0
      %p38 = por %p36, %p37
      %p39 = scmp.ne.s32.totalorder %s28, %s31
      %p40 = scmp.eq.s32.totalorder %s23, 1
      %p41 = por %p39, %p40
      %p42 = scmp.ne.s32.totalorder %s31, %s32
      %p43 = scmp.eq.s32.totalorder %s23, 0
      %p44 = por %p42, %p43
      %p45 = scmp.ne.s32.totalorder %s31, %s32
      %p46 = scmp.eq.s32.totalorder %s24, 1
      %p47 = por %p45, %p46
      %p49 = scmp.ne.s32.totalorder %s32, %s48
      %p50 = scmp.eq.s32.totalorder %s24, 0
      %p51 = por %p49, %p50
      %s53 = sadd.s32 %s52, 1
      %p56 = scmp.eq.s32.totalorder %s18, 1
      %p57 = scmp.ne.s32.totalorder %s52, %s54
      %p58 = scmp.eq.s32.totalorder %s18, 0
      %p59 = por %p57, %p58
      %p60 = scmp.ne.s32.totalorder %s52, %s54
      %p61 = scmp.eq.s32.totalorder %s23, 1
      %p62 = por %p60, %p61
      %p63 = scmp.ne.s32.totalorder %s54, %s55
      %p64 = scmp.eq.s32.totalorder %s23, 0
      %p65 = por %p63, %p64
      %p66 = scmp.ne.s32.totalorder %s54, %s55
      %p67 = scmp.eq.s32.totalorder %s24, 1
      %p68 = por %p66, %p67
      %p70 = scmp.ne.s32.totalorder %s55, %s69
      %p71 = scmp.eq.s32.totalorder %s24, 0
      %p72 = por %p70, %p71
      %s74 = sadd.s32 %s73, 1
      %p77 = scmp.eq.s32.totalorder %s18, 1
      %p78 = scmp.ne.s32.totalorder %s73, %s75
      %p79 = scmp.eq.s32.totalorder %s18, 0
      %p80 = por %p78, %p79
      %p81 = scmp.ne.s32.totalorder %s73, %s75
      %p82 = scmp.eq.s32.totalorder %s23, 1
      %p83 = por %p81, %p82
      %p84 = scmp.ne.s32.totalorder %s75, %s76
      %p85 = scmp.eq.s32.totalorder %s23, 0
      %p86 = por %p84, %p85
      %p87 = scmp.ne.s32.totalorder %s75, %s76
      %p88 = scmp.eq.s32.totalorder %s24, 1
      %p89 = por %p87, %p88
      %p91 = scmp.ne.s32.totalorder %s76, %s90
      %p92 = scmp.eq.s32.totalorder %s24, 0
      %p93 = por %p91, %p92
      %s95 = sadd.s32 %s94, 1
      %p98 = scmp.eq.s32.totalorder %s18, 1
      %p99 = scmp.ne.s32.totalorder %s94, %s96
      %p100 = scmp.eq.s32.totalorder %s18, 0
      %p101 = por %p99, %p100
      %p102 = scmp.ne.s32.totalorder %s94, %s96
      %p103 = scmp.eq.s32.totalorder %s23, 1
      %p104 = por %p102, %p103
      %p105 = scmp.ne.s32.totalorder %s96, %s97
      %p106 = scmp.eq.s32.totalorder %s23, 0
      %p107 = por %p105, %p106
      %p108 = scmp.ne.s32.totalorder %s96, %s97
      %p109 = scmp.eq.s32.totalorder %s24, 1
      %p110 = por %p108, %p109
      %p112 = scmp.ne.s32.totalorder %s97, %s111
      %p113 = scmp.eq.s32.totalorder %s24, 0
      %p114 = por %p112, %p113
      %s116 = sadd.s32 %s115, 1
      %p119 = scmp.eq.s32.totalorder %s18, 1
      %p120 = scmp.ne.s32.totalorder %s115, %s117
      %p121 = scmp.eq.s32.totalorder %s18, 0
      %p122 = por %p120, %p121
      %p123 = scmp.ne.s32.totalorder %s115, %s117
      %p124 = scmp.eq.s32.totalorder %s23, 1
      %p125 = por %p123, %p124
      %p126 = scmp.ne.s32.totalorder %s117, %s118
      %p127 = scmp.eq.s32.totalorder %s23, 0
      %p128 = por %p126, %p127
      %p129 = scmp.ne.s32.totalorder %s117, %s118
      %p130 = scmp.eq.s32.totalorder %s24, 1
      %p131 = por %p129, %p130
      %p133 = scmp.ne.s32.totalorder %s118, %s132
      %p134 = scmp.eq.s32.totalorder %s24, 0
      %p135 = por %p133, %p134
      %s137 = sadd.s32 %s136, 1
      %p140 = scmp.eq.s32.totalorder %s18, 1
      %p141 = scmp.ne.s32.totalorder %s136, %s138
      %p142 = scmp.eq.s32.totalorder %s18, 0
      %p143 = por %p141, %p142
      %p144 = scmp.ne.s32.totalorder %s136, %s138
      %p145 = scmp.eq.s32.totalorder %s23, 1
      %p146 = por %p144, %p145
      %p147 = scmp.ne.s32.totalorder %s138, %s139
      %p148 = scmp.eq.s32.totalorder %s23, 0
      %p149 = por %p147, %p148
      %p150 = scmp.ne.s32.totalorder %s138, %s139
      %p151 = scmp.eq.s32.totalorder %s24, 1
      %p152 = por %p150, %p151
      %p154 = scmp.ne.s32.totalorder %s139, %s153
      %p155 = scmp.eq.s32.totalorder %s24, 0
      %p156 = por %p154, %p155
      %s158 = sadd.s32 %s157, 1
      %p161 = scmp.eq.s32.totalorder %s18, 1
      %p162 = scmp.ne.s32.totalorder %s157, %s159
      %p163 = scmp.eq.s32.totalorder %s18, 0
      %p164 = por %p162, %p163
      %p165 = scmp.ne.s32.totalorder %s157, %s159
      %p166 = scmp.eq.s32.totalorder %s23, 1
      %p167 = por %p165, %p166
      %p168 = scmp.ne.s32.totalorder %s159, %s160
      %p169 = scmp.eq.s32.totalorder %s23, 0
      %p170 = por %p168, %p169
      %p171 = scmp.ne.s32.totalorder %s159, %s160
      %p172 = scmp.eq.s32.totalorder %s24, 1
      %p173 = por %p171, %p172
      %p175 = scmp.ne.s32.totalorder %s160, %s174
      %p176 = scmp.eq.s32.totalorder %s24, 0
      %p177 = por %p175, %p176
      %s178 = ssub.s32 %s18, %s25
      %p179 = scmp.eq.s32.totalorder %s178, 0
      %s181 = sadd.s32 %s180, 1
      %s182 = scalar_select %p179, %s180, %s181
      %p185 = pneg %p179
      %p186 = scmp.eq.s32.totalorder %s18, 1
      %p187 = por %p185, %p186
      %p188 = scmp.ne.s32.totalorder %s180, %s183
      %p189 = scmp.eq.s32.totalorder %s18, 0
      %p190 = por %p188, %p189
      %p191 = scmp.ne.s32.totalorder %s180, %s183
      %p192 = scmp.eq.s32.totalorder %s23, 1
      %p193 = por %p191, %p192
      %p194 = scmp.ne.s32.totalorder %s183, %s184
      %p195 = scmp.eq.s32.totalorder %s23, 0
      %p196 = por %p194, %p195
      %p197 = scmp.ne.s32.totalorder %s183, %s184
      %p198 = scmp.eq.s32.totalorder %s24, 1
      %p199 = por %p197, %p198
      %p201 = scmp.ne.s32.totalorder %s184, %s200
      %p202 = scmp.eq.s32.totalorder %s24, 0
      %p203 = por %p201, %p202
      %p204 = scmp.le.s32.totalorder 1, %s18
      %p205 = scmp.lt.s32.totalorder %s18, 3
      %p206 = pnand %p204, %p205
      %p207 = pneg %p206
      // Predicated region
      $region9: #{tpu_custom_call.1} parent=5 // pred_check
        _
      $region10: #{tpu_custom_call.1} parent=5 // pred_check_branch
        %209 = sbr.rel (%p206) target = $region12
      $region11: #{tpu_custom_call.1} parent=5 // pred_region
        %s210 = ssub.s32 %s18, 1
        // Predicated region
        $region13: #{tpu_custom_call.1} parent=11 // pred_check
          %p211 = pneg %p65
        $region14: #{tpu_custom_call.1} parent=11 // pred_check_branch
          %213 = sbr.rel (%p211) target = $region16
        $region15: #{tpu_custom_call.1} parent=11 // pred_region
          %s215 = ssub.s32 128, 128
          %216 = vsyncadd [#allocation3], %s215
          %s217 = sshll.u32 [#allocation2], 4
          %s218 = int_to_ptr.vmem [resolvable:$true] %s217
          %223 = dma.hbm_to_vmem [thread:$0]  %s1, 128, %s218, [#allocation3], 64, 64, 4
        $region16: #{tpu_custom_call.1} parent=11 // pred_fallthru
          _
        // Predicated region
        $region17: #{tpu_custom_call.1} parent=11 // pred_check
          %p224 = pneg %p86
        $region18: #{tpu_custom_call.1} parent=11 // pred_check_branch
          %226 = sbr.rel (%p224) target = $region20
        $region19: #{tpu_custom_call.1} parent=11 // pred_region
          _
        $region20: #{tpu_custom_call.1} parent=11 // pred_fallthru
          _
        // Predicated region
        $region21: #{tpu_custom_call.1} parent=11 // pred_check
          %p227 = pneg %p107
        $region22: #{tpu_custom_call.1} parent=11 // pred_check_branch
          %229 = sbr.rel (%p227) target = $region24
        $region23: #{tpu_custom_call.1} parent=11 // pred_region
          _
        $region24: #{tpu_custom_call.1} parent=11 // pred_fallthru
          _
        // Predicated region
        $region25: #{tpu_custom_call.1} parent=11 // pred_check
          %p230 = pneg %p128
        $region26: #{tpu_custom_call.1} parent=11 // pred_check_branch
          %232 = sbr.rel (%p230) target = $region28
        $region27: #{tpu_custom_call.1} parent=11 // pred_region
          %s234 = ssub.s32 64, 64
          %235 = vsyncadd [#allocation6], %s234
          %s237 = sshll.u32 [#allocation5], 4
          %s238 = int_to_ptr.vmem [resolvable:$true] %s237
          %240 = dma.hbm_to_vmem [thread:$0]  %s4, 64, %s238, [#allocation6]
        $region28: #{tpu_custom_call.1} parent=11 // pred_fallthru
          _
        // Predicated region
        $region29: #{tpu_custom_call.1} parent=11 // pred_check
          %p241 = pneg %p149
        $region30: #{tpu_custom_call.1} parent=11 // pred_check_branch
          %243 = sbr.rel (%p241) target = $region32
        $region31: #{tpu_custom_call.1} parent=11 // pred_region
          %s245 = ssub.s32 1024, 1024
          %246 = vsyncadd [#allocation6], %s245
          %s247 = sshll.u32 [#allocation7], 4
          %s248 = int_to_ptr.vmem [resolvable:$true] %s247
          %253 = dma.hbm_to_vmem [thread:$0]  %s5, 1024, %s248, [#allocation6], 64, 64, 4
        $region32: #{tpu_custom_call.1} parent=11 // pred_fallthru
          _
        // Predicated region
        $region33: #{tpu_custom_call.1} parent=11 // pred_check
          %p254 = pneg %p170
        $region34: #{tpu_custom_call.1} parent=11 // pred_check_branch
          %256 = sbr.rel (%p254) target = $region36
        $region35: #{tpu_custom_call.1} parent=11 // pred_region
          _
        $region36: #{tpu_custom_call.1} parent=11 // pred_fallthru
          _
      $region12: #{tpu_custom_call.1} parent=5 // pred_fallthru
        _
      %p257 = scmp.lt.s32.totalorder %s18, 2
      // Predicated region
      $region37: #{tpu_custom_call.1} parent=5 // pred_check
        %p258 = pneg %p257
      $region38: #{tpu_custom_call.1} parent=5 // pred_check_branch
        %260 = sbr.rel (%p258) target = $region40
      $region39: #{tpu_custom_call.1} parent=5 // pred_region
        // Predicated region
        $region41: #{tpu_custom_call.1} parent=39 // pred_check
          %p261 = pneg %p38
        $region42: #{tpu_custom_call.1} parent=39 // pred_check_branch
          %263 = sbr.rel (%p261) target = $region44
        $region43: #{tpu_custom_call.1} parent=39 // pred_region
          %s264 = smul.u32 3, %s18
          %p265 = scmp.lt.s32.totalorder %s264, 5
          %s266 = scalar_select %p265, %s264, 5
          %s267 = smul.addr %s266, 8
          %s268 = scalar_lea.vmem %s0, %s267
          %s269 = smul.u32 3, %s18
        $region44: #{tpu_custom_call.1} parent=39 // pred_fallthru
          _
      $region40: #{tpu_custom_call.1} parent=5 // pred_fallthru
        _
      %p270 = scmp.le.s32.totalorder 1, %s18
      %p271 = scmp.lt.s32.totalorder %s18, 3
      %p272 = pnand %p270, %p271
      %p273 = pneg %p272
      // Predicated region
      $region45: #{tpu_custom_call.1} parent=5 // pred_check
        _
      $region46: #{tpu_custom_call.1} parent=5 // pred_check_branch
        %275 = sbr.rel (%p272) target = $region48
      $region47: #{tpu_custom_call.1} parent=5 // pred_region
        %s276 = ssub.s32 %s18, 1
        // Predicated region
        $region49: #{tpu_custom_call.1} parent=47 // pred_check
          %p277 = pneg %p65
        $region50: #{tpu_custom_call.1} parent=47 // pred_check_branch
          %279 = sbr.rel (%p277) target = $region52
        $region51: #{tpu_custom_call.1} parent=47 // pred_region
          %280 = dma.done [#allocation3], 128
        $region52: #{tpu_custom_call.1} parent=47 // pred_fallthru
          _
        // Predicated region
        $region53: #{tpu_custom_call.1} parent=47 // pred_check
          %p281 = pneg %p128
        $region54: #{tpu_custom_call.1} parent=47 // pred_check_branch
          %283 = sbr.rel (%p281) target = $region56
        $region55: #{tpu_custom_call.1} parent=47 // pred_region
          %284 = dma.done [#allocation6], 64
        $region56: #{tpu_custom_call.1} parent=47 // pred_fallthru
          _
        // Predicated region
        $region57: #{tpu_custom_call.1} parent=47 // pred_check
          %p285 = pneg %p149
        $region58: #{tpu_custom_call.1} parent=47 // pred_check_branch
          %287 = sbr.rel (%p285) target = $region60
        $region59: #{tpu_custom_call.1} parent=47 // pred_region
          %288 = dma.done [#allocation6], 1024
        $region60: #{tpu_custom_call.1} parent=47 // pred_fallthru
          _
        %s289 = smul.u32 3, %s23
        %p290 = scmp.lt.s32.totalorder %s289, 5
        %s291 = scalar_select %p290, %s289, 5
        %s292 = smul.addr %s291, 8
        %s293 = scalar_lea.vmem %s0, %s292
        %p294 = pneg %p44
        %p295 = pneg %p41
        %p296 = pneg %p65
        %p297 = pneg %p62
        %p298 = pneg %p86
        %p299 = pneg %p83
        %p300 = pneg %p107
        %p301 = pneg %p104
        %p302 = pneg %p128
        %p303 = pneg %p125
        %p304 = pneg %p149
        %p305 = pneg %p146
        %p306 = pneg %p170
        %p307 = pneg %p167
        %p308 = pneg %p196
        %p309 = pneg %p193
        %s310 = sand.u32 %s183, 1
        %s311 = scalar_lea.sflag [#allocation4], %s310
        %s312 = sand.u32 %s183, 1
        %s313 = smul.addr %s312, 24
        %s314 = scalar_lea.vmem [#allocation8], %s313
        %s315 = smul.u32 3, %s23
        %p316 = scmp.lt.s32.totalorder %s315, 5
        %s317 = scalar_select %p316, %s315, 5
        %s318 = smul.addr %s317, 8
        %s319 = scalar_lea.vmem %s0, %s318
        %s320 = smul.u32 3, %s23
        %s321 = smul.u32 3, %s23
        %v323 = vld [vmem:[%s319] sm:$0xff]
        %v324 = vld [vmem:[%s319 + $0x8] sm:$0xff]
        %v325 = vld [vmem:[%s319 + $0x10] sm:$0xff]
        %vm326 = vcmp.ne.f32.partialorder %v323, %v323
        %vm327 = vcmp.ne.f32.partialorder %v324, %v324
        %vm328 = vcmp.ne.f32.partialorder %v325, %v325
        %v329 = vmax.f32 %v323, -3.3895314e+38
        %v330 = vmax.f32 %v324, -3.3895314e+38
        %v331 = vmax.f32 %v325, -3.3895314e+38
        %v332 = vmin.f32 %v329, 3.3895314e+38
        %v333 = vmin.f32 %v330, 3.3895314e+38
        %v334 = vmin.f32 %v331, 3.3895314e+38
        %v335 = vsel %vm326, 0.0, %v332
        %v336 = vsel %vm327, 0.0, %v333
        %v337 = vsel %vm328, 0.0, %v334
        %v338 = vpack.c.bf16 %v336, %v335
        %v339 = vpack.c.bf16 %v337, %v337
        %v340 = vld [vmem:[#allocation2] sm:$0xf]
        %v341 = vld [vmem:[#allocation2 + $0x4] sm:$0xf]
        %v342 = vld [vmem:[%s2] sm:$0x7]
        %v343 = vlaneseq
        %v344 = vshrl.u32 %v343, 7
        %v345 = vsub.s32 0, %v344
        %v346 = vrot.slane %v342, %v345
        %v349 = vunpack.c.l.b16 %v340
        %v350 = vunpack.c.l.b16 %v341
        %v351 = vpack.c.b16 %v350, %v349
        %vm353 = vcmask 130048
        %v355 = vsel %vm353, %v338, 0
        %v358 = vsel %vm353, %v339, 0
        %360 = vmatprep.subr.bf16.mxu0 0
        %361 = vmatpush1.bf16.msra.mxu0 0
        %362 = vmatprep.subr.bf16.mxu0 0
        %363 = vmatpush1.bf16.msra.mxu0 0
        %364 = vmatprep.subr.bf16.mxu0 0
        %365 = vmatpush1.bf16.msra.mxu0 0
        %366 = vmatprep.subr.bf16.mxu0 0
        %367 = vmatpush1.bf16.msra.mxu0 0
        %368 = vmatprep.subr.bf16.mxu0 0
        %369 = vmatpush1.bf16.msra.mxu0 0
        %370 = vmatprep.subr.bf16.mxu0 0
        %371 = vmatpush1.bf16.msra.mxu0 0
        %372 = vmatprep.subr.bf16.mxu0 0
        %373 = vmatpush1.bf16.msra.mxu0 0
        %374 = vmatprep.subr.bf16.mxu0 0
        %375 = vmatpush1.bf16.msra.mxu0 %v351
        %376 = vmatprep.subr.bf16.mxu0 0
        %377 = vmatpush2.bf16.msra.mxu0 0
        %378 = vmatprep.subr.bf16.mxu0 0
        %379 = vmatpush2.bf16.msra.mxu0 0
        %380 = vmatprep.subr.bf16.mxu0 0
        %381 = vmatpush2.bf16.msra.mxu0 0
        %382 = vmatprep.subr.bf16.mxu0 0
        %383 = vmatpush2.bf16.msra.mxu0 0
        %384 = vmatprep.subr.bf16.mxu0 0
        %385 = vmatpush2.bf16.msra.mxu0 0
        %386 = vmatprep.subr.bf16.mxu0 0
        %387 = vmatpush2.bf16.msra.mxu0 0
        %388 = vmatprep.subr.bf16.mxu0 0
        %389 = vmatpush2.bf16.msra.mxu0 0
        %390 = vmatprep.subr.bf16.mxu0 0
        %391 = vmatpush2.bf16.msra.mxu0 0
        %392 = vmatprep.mubr.bf16.mxu0 0
        %393 = vmatmul.mubr.bf16.gmra.mxu0 %v355
        %v394 = vpop.f32.mrf.mxu0
        %v395 = vadd.f32 %v346, %v394
        %v396 = vpop.f32.mrf.mxu0
        %v397 = vpop.f32.mrf.mxu0
        %v398 = vadd.f32 %v346, %v397
        %v399 = vpop.f32.mrf.mxu0
        %400 = vmatprep.mubr.bf16.mxu0 0
        %401 = vmatmul.mubr.bf16.gmra.mxu0 %v358
        %v402 = vpop.f32.mrf.mxu0
        %v403 = vadd.f32 %v346, %v402
        %v404 = vpop.f32.mrf.mxu0
        %v405 = vpop.f32.mrf.mxu0
        %v406 = vpop.f32.mrf.mxu0
        %407 = vdwg.mxu0
        %v408 = vmax.f32 %v395, 0.0
        %v409 = vmax.f32 %v398, 0.0
        %v410 = vmax.f32 %v403, 0.0
        %411 = vadd.xlane.f32.xlu0 %v408
        %v412 = vpop.xlane.xlu0 %411
        %413 = vadd.xlane.f32.xlu0 %v409
        %v414 = vpop.xlane.xlu0 %413
        %415 = vadd.xlane.f32.xlu0 %v410
        %v416 = vpop.xlane.xlu0 %415
        %v417 = vmul.f32 %v408, %v408
        %v418 = vmul.f32 %v409, %v409
        %v419 = vmul.f32 %v410, %v410
        %420 = vadd.xlane.f32.xlu0 %v417
        %v421 = vpop.xlane.xlu0 %420
        %422 = vadd.xlane.f32.xlu0 %v418
        %v423 = vpop.xlane.xlu0 %422
        %424 = vadd.xlane.f32.xlu0 %v419
        %v425 = vpop.xlane.xlu0 %424
        %v426 = vmul.f32 %v412, 0.03125
        %v427 = vmul.f32 %v414, 0.03125
        %v428 = vmul.f32 %v416, 0.03125
        %v429 = vmul.f32 %v421, 0.03125
        %v430 = vmul.f32 %v423, 0.03125
        %v431 = vmul.f32 %v425, 0.03125
        %v432 = vmul.f32 %v426, %v426
        %v433 = vmul.f32 %v427, %v427
        %v434 = vmul.f32 %v428, %v428
        %v435 = vsub.f32 %v429, %v432
        %v436 = vsub.f32 %v430, %v433
        %v437 = vsub.f32 %v431, %v434
        %v438 = vmax.f32 %v435, 0.0
        %v439 = vmax.f32 %v436, 0.0
        %v440 = vmax.f32 %v437, 0.0
        %v441 = vadd.f32 %v438, 1e-05
        %v442 = vadd.f32 %v439, 1e-05
        %v443 = vadd.f32 %v440, 1e-05
        %v444 = vrsqrt.pop %v441
        %v445 = vrsqrt.pop %v442
        %v446 = vrsqrt.pop %v443
        %v447 = vsub.f32 %v408, %v426
        %v448 = vsub.f32 %v409, %v427
        %v449 = vsub.f32 %v410, %v428
        %v450 = vmul.f32 %v447, %v444
        %v451 = vmul.f32 %v448, %v445
        %v452 = vmul.f32 %v449, %v446
        %v453 = vpack.c.bf16 %v451, %v450
        %v454 = vpack.c.bf16 %v452, %v452
        %v455 = vpack.c.bf16 %v342, %v342
        %v457 = vshrl.u32 %v455, 16
        %v458 = vpack.i.b16 %v457, %v457
        %v460 = vlaneseq
        %v461 = vshrl.u32 %v460, 7
        %v462 = vsub.s32 0, %v461
        %v463 = vrot.slane %v458, %v462
        %v464 = vmul.bf16 %v453, %v463
        %v465 = vmul.bf16 %v454, %v463
        %v466 = vpack.i.b16 %v455, %v455
        %v468 = vlaneseq
        %v469 = vshrl.u32 %v468, 7
        %v470 = vsub.s32 1, %v469
        %v471 = vrot.slane %v466, %v470
        %v472 = vadd.bf16 %v464, %v471
        %v473 = vadd.bf16 %v465, %v471
        %v474 = vld [vmem:[%s3] sm:$0xf]
        %v475 = vld [vmem:[%s3 + $0x4] sm:$0xf]
        %v476 = vld [vmem:[%s3 + $0x8] sm:$0xf]
        %v477 = vld [vmem:[%s3 + $0xc] sm:$0xf]
        %v478 = vld [vmem:[%s3 + $0x10] sm:$0xf]
        %v479 = vld [vmem:[%s3 + $0x14] sm:$0xf]
        %v480 = vld [vmem:[%s3 + $0x18] sm:$0xf]
        %v481 = vld [vmem:[%s3 + $0x1c] sm:$0xf]
        %v482 = vld [vmem:[%s3 + $0x20] sm:$0xf]
        %v483 = vld [vmem:[%s3 + $0x24] sm:$0xf]
        %v484 = vld [vmem:[%s3 + $0x28] sm:$0xf]
        %v485 = vld [vmem:[%s3 + $0x2c] sm:$0xf]
        %v486 = vld [vmem:[%s3 + $0x30] sm:$0xf]
        %v487 = vld [vmem:[%s3 + $0x34] sm:$0xf]
        %v488 = vld [vmem:[%s3 + $0x38] sm:$0xf]
        %v489 = vld [vmem:[%s3 + $0x3c] sm:$0xf]
        %v490 = vld [vmem:[#allocation5] sm:$0x7]
        %v491 = vlaneseq
        %v492 = vshrl.u32 %v491, 7
        %v493 = vsub.s32 0, %v492
        %v494 = vrot.slane %v490, %v493
        %v511 = vunpack.c.l.b16 %v474
        %v512 = vunpack.c.l.b16 %v475
        %v513 = vunpack.c.l.b16 %v476
        %v514 = vunpack.c.l.b16 %v477
        %v515 = vunpack.c.l.b16 %v478
        %v516 = vunpack.c.l.b16 %v479
        %v517 = vunpack.c.l.b16 %v480
        %v518 = vunpack.c.l.b16 %v481
        %v519 = vunpack.c.l.b16 %v482
        %v520 = vunpack.c.l.b16 %v483
        %v521 = vunpack.c.l.b16 %v484
        %v522 = vunpack.c.l.b16 %v485
        %v523 = vunpack.c.l.b16 %v486
        %v524 = vunpack.c.l.b16 %v487
        %v525 = vunpack.c.l.b16 %v488
        %v526 = vunpack.c.l.b16 %v489
        %v527 = vpack.c.b16 %v512, %v511
        %v528 = vpack.c.b16 %v514, %v513
        %v529 = vpack.c.b16 %v516, %v515
        %v530 = vpack.c.b16 %v518, %v517
        %v531 = vpack.c.b16 %v520, %v519
        %v532 = vpack.c.b16 %v522, %v521
        %v533 = vpack.c.b16 %v524, %v523
        %v534 = vpack.c.b16 %v526, %v525
        %543 = vmatprep.subr.bf16.mxu0 0
        %544 = vmatpush1.bf16.msra.mxu0 %v534
        %545 = vmatprep.subr.bf16.mxu0 0
        %546 = vmatpush1.bf16.msra.mxu0 %v533
        %547 = vmatprep.subr.bf16.mxu0 0
        %548 = vmatpush1.bf16.msra.mxu0 %v532
        %549 = vmatprep.subr.bf16.mxu0 0
        %550 = vmatpush1.bf16.msra.mxu0 %v531
        %551 = vmatprep.subr.bf16.mxu0 0
        %552 = vmatpush1.bf16.msra.mxu0 %v530
        %553 = vmatprep.subr.bf16.mxu0 0
        %554 = vmatpush1.bf16.msra.mxu0 %v529
        %555 = vmatprep.subr.bf16.mxu0 0
        %556 = vmatpush1.bf16.msra.mxu0 %v528
        %557 = vmatprep.subr.bf16.mxu0 0
        %558 = vmatpush1.bf16.msra.mxu0 %v527
        %559 = vmatprep.subr.bf16.mxu0 0
        %560 = vmatpush2.bf16.msra.mxu0 0
        %561 = vmatprep.subr.bf16.mxu0 0
        %562 = vmatpush2.bf16.msra.mxu0 0
        %563 = vmatprep.subr.bf16.mxu0 0
        %564 = vmatpush2.bf16.msra.mxu0 0
        %565 = vmatprep.subr.bf16.mxu0 0
        %566 = vmatpush2.bf16.msra.mxu0 0
        %567 = vmatprep.subr.bf16.mxu0 0
        %568 = vmatpush2.bf16.msra.mxu0 0
        %569 = vmatprep.subr.bf16.mxu0 0
        %570 = vmatpush2.bf16.msra.mxu0 0
        %571 = vmatprep.subr.bf16.mxu0 0
        %572 = vmatpush2.bf16.msra.mxu0 0
        %573 = vmatprep.subr.bf16.mxu0 0
        %574 = vmatpush2.bf16.msra.mxu0 0
        %575 = vmatprep.mubr.bf16.mxu0 0
        %576 = vmatmul.mubr.bf16.gmra.mxu0 %v472
        %v577 = vpop.f32.mrf.mxu0
        %v578 = vadd.f32 %v494, %v577
        %v579 = vpop.f32.mrf.mxu0
        %v580 = vpop.f32.mrf.mxu0
        %v581 = vadd.f32 %v494, %v580
        %v582 = vpop.f32.mrf.mxu0
        %583 = vmatprep.mubr.bf16.mxu0 0
        %584 = vmatmul.mubr.bf16.gmra.mxu0 %v473
        %v585 = vpop.f32.mrf.mxu0
        %v586 = vadd.f32 %v494, %v585
        %v587 = vpop.f32.mrf.mxu0
        %v588 = vpop.f32.mrf.mxu0
        %v589 = vpop.f32.mrf.mxu0
        %590 = vdwg.mxu0
        %v591 = vmax.f32 %v578, 0.0
        %v592 = vmax.f32 %v581, 0.0
        %v593 = vmax.f32 %v586, 0.0
        %594 = vadd.xlane.f32.xlu0 %v591
        %v595 = vpop.xlane.xlu0 %594
        %596 = vadd.xlane.f32.xlu0 %v592
        %v597 = vpop.xlane.xlu0 %596
        %598 = vadd.xlane.f32.xlu0 %v593
        %v599 = vpop.xlane.xlu0 %598
        %v600 = vmul.f32 %v591, %v591
        %v601 = vmul.f32 %v592, %v592
        %v602 = vmul.f32 %v593, %v593
        %603 = vadd.xlane.f32.xlu0 %v600
        %v604 = vpop.xlane.xlu0 %603
        %605 = vadd.xlane.f32.xlu0 %v601
        %v606 = vpop.xlane.xlu0 %605
        %607 = vadd.xlane.f32.xlu0 %v602
        %v608 = vpop.xlane.xlu0 %607
        %v609 = vmul.f32 %v595, 0.03125
        %v610 = vmul.f32 %v597, 0.03125
        %v611 = vmul.f32 %v599, 0.03125
        %v612 = vmul.f32 %v604, 0.03125
        %v613 = vmul.f32 %v606, 0.03125
        %v614 = vmul.f32 %v608, 0.03125
        %v615 = vmul.f32 %v609, %v609
        %v616 = vmul.f32 %v610, %v610
        %v617 = vmul.f32 %v611, %v611
        %v618 = vsub.f32 %v612, %v615
        %v619 = vsub.f32 %v613, %v616
        %v620 = vsub.f32 %v614, %v617
        %v621 = vmax.f32 %v618, 0.0
        %v622 = vmax.f32 %v619, 0.0
        %v623 = vmax.f32 %v620, 0.0
        %v624 = vadd.f32 %v621, 1e-05
        %v625 = vadd.f32 %v622, 1e-05
        %v626 = vadd.f32 %v623, 1e-05
        %v627 = vrsqrt.pop %v624
        %v628 = vrsqrt.pop %v625
        %v629 = vrsqrt.pop %v626
        %v630 = vsub.f32 %v591, %v609
        %v631 = vsub.f32 %v592, %v610
        %v632 = vsub.f32 %v593, %v611
        %v633 = vmul.f32 %v630, %v627
        %v634 = vmul.f32 %v631, %v628
        %v635 = vmul.f32 %v632, %v629
        %v636 = vpack.c.bf16 %v634, %v633
        %v637 = vpack.c.bf16 %v635, %v635
        %v638 = vpack.c.bf16 %v490, %v490
        %v640 = vshrl.u32 %v638, 16
        %v641 = vpack.i.b16 %v640, %v640
        %v643 = vlaneseq
        %v644 = vshrl.u32 %v643, 7
        %v645 = vsub.s32 0, %v644
        %v646 = vrot.slane %v641, %v645
        %v647 = vmul.bf16 %v636, %v646
        %v648 = vmul.bf16 %v637, %v646
        %v649 = vpack.i.b16 %v638, %v638
        %v651 = vlaneseq
        %v652 = vshrl.u32 %v651, 7
        %v653 = vsub.s32 1, %v652
        %v654 = vrot.slane %v649, %v653
        %v655 = vadd.bf16 %v647, %v654
        %v656 = vadd.bf16 %v648, %v654
        %v657 = vld [vmem:[#allocation7] sm:$0xf]
        %v658 = vld [vmem:[#allocation7 + $0x4] sm:$0xf]
        %v659 = vld [vmem:[#allocation7 + $0x8] sm:$0xf]
        %v660 = vld [vmem:[#allocation7 + $0xc] sm:$0xf]
        %v661 = vld [vmem:[#allocation7 + $0x10] sm:$0xf]
        %v662 = vld [vmem:[#allocation7 + $0x14] sm:$0xf]
        %v663 = vld [vmem:[#allocation7 + $0x18] sm:$0xf]
        %v664 = vld [vmem:[#allocation7 + $0x1c] sm:$0xf]
        %v665 = vld [vmem:[#allocation7 + $0x20] sm:$0xf]
        %v666 = vld [vmem:[#allocation7 + $0x24] sm:$0xf]
        %v667 = vld [vmem:[#allocation7 + $0x28] sm:$0xf]
        %v668 = vld [vmem:[#allocation7 + $0x2c] sm:$0xf]
        %v669 = vld [vmem:[#allocation7 + $0x30] sm:$0xf]
        %v670 = vld [vmem:[#allocation7 + $0x34] sm:$0xf]
        %v671 = vld [vmem:[#allocation7 + $0x38] sm:$0xf]
        %v672 = vld [vmem:[#allocation7 + $0x3c] sm:$0xf]
        %v673 = vld [vmem:[%s6] sm:$0x1]
        %v675 = vlaneseq
        %v676 = vshrl.u32 %v675, 7
        %v677 = vsub.s32 0, %v676
        %v678 = vrot.slane %v673, %v677
        %v696 = vunpack.c.l.b16 %v657
        %v697 = vunpack.c.l.b16 %v658
        %v698 = vunpack.c.l.b16 %v659
        %v699 = vunpack.c.l.b16 %v660
        %v700 = vunpack.c.l.b16 %v661
        %v701 = vunpack.c.l.b16 %v662
        %v702 = vunpack.c.l.b16 %v663
        %v703 = vunpack.c.l.b16 %v664
        %v704 = vunpack.c.l.b16 %v665
        %v705 = vunpack.c.l.b16 %v666
        %v706 = vunpack.c.l.b16 %v667
        %v707 = vunpack.c.l.b16 %v668
        %v708 = vunpack.c.l.b16 %v669
        %v709 = vunpack.c.l.b16 %v670
        %v710 = vunpack.c.l.b16 %v671
        %v711 = vunpack.c.l.b16 %v672
        %v712 = vpack.c.b16 %v697, %v696
        %v713 = vpack.c.b16 %v699, %v698
        %v714 = vpack.c.b16 %v701, %v700
        %v715 = vpack.c.b16 %v703, %v702
        %v716 = vpack.c.b16 %v705, %v704
        %v717 = vpack.c.b16 %v707, %v706
        %v718 = vpack.c.b16 %v709, %v708
        %v719 = vpack.c.b16 %v711, %v710
        %728 = vmatprep.subr.bf16.mxu0 0
        %729 = vmatpush1.bf16.msra.mxu0 %v719
        %730 = vmatprep.subr.bf16.mxu0 0
        %731 = vmatpush1.bf16.msra.mxu0 %v718
        %732 = vmatprep.subr.bf16.mxu0 0
        %733 = vmatpush1.bf16.msra.mxu0 %v717
        %734 = vmatprep.subr.bf16.mxu0 0
        %735 = vmatpush1.bf16.msra.mxu0 %v716
        %736 = vmatprep.subr.bf16.mxu0 0
        %737 = vmatpush1.bf16.msra.mxu0 %v715
        %738 = vmatprep.subr.bf16.mxu0 0
        %739 = vmatpush1.bf16.msra.mxu0 %v714
        %740 = vmatprep.subr.bf16.mxu0 0
        %741 = vmatpush1.bf16.msra.mxu0 %v713
        %742 = vmatprep.subr.bf16.mxu0 0
        %743 = vmatpush1.bf16.msra.mxu0 %v712
        %744 = vmatprep.subr.bf16.mxu0 0
        %745 = vmatpush2.bf16.msra.mxu0 0
        %746 = vmatprep.subr.bf16.mxu0 0
        %747 = vmatpush2.bf16.msra.mxu0 0
        %748 = vmatprep.subr.bf16.mxu0 0
        %749 = vmatpush2.bf16.msra.mxu0 0
        %750 = vmatprep.subr.bf16.mxu0 0
        %751 = vmatpush2.bf16.msra.mxu0 0
        %752 = vmatprep.subr.bf16.mxu0 0
        %753 = vmatpush2.bf16.msra.mxu0 0
        %754 = vmatprep.subr.bf16.mxu0 0
        %755 = vmatpush2.bf16.msra.mxu0 0
        %756 = vmatprep.subr.bf16.mxu0 0
        %757 = vmatpush2.bf16.msra.mxu0 0
        %758 = vmatprep.subr.bf16.mxu0 0
        %759 = vmatpush2.bf16.msra.mxu0 0
        %760 = vmatprep.mubr.bf16.mxu0 0
        %761 = vmatmul.mubr.bf16.gmra.mxu0 %v655
        %v762 = vpop.f32.mrf.mxu0
        %v763 = vadd.f32 %v678, %v762
        %v764 = vpop.f32.mrf.mxu0
        %v765 = vpop.f32.mrf.mxu0
        %v766 = vadd.f32 %v678, %v765
        %v767 = vpop.f32.mrf.mxu0
        %768 = vmatprep.mubr.bf16.mxu0 0
        %769 = vmatmul.mubr.bf16.gmra.mxu0 %v656
        %v770 = vpop.f32.mrf.mxu0
        %v771 = vadd.f32 %v678, %v770
        %v772 = vpop.f32.mrf.mxu0
        %v773 = vpop.f32.mrf.mxu0
        %v774 = vpop.f32.mrf.mxu0
        %775 = vdwg.mxu0
        %776 = vst [vmem:[%s314] sm:$0xff] %v763
        %777 = vst [vmem:[%s314 + $0x8] sm:$0xff] %v766
        %778 = vst [vmem:[%s314 + $0x10] sm:$0xff] %v771
        %s779 = sand.u32 %s183, 1
        %s780 = scalar_lea.sflag [#allocation4], %s779
        %s781 = sand.u32 %s183, 1
        %s782 = smul.addr %s781, 24
        %s783 = scalar_lea.vmem [#allocation8], %s782
        // Predicated region
        $region61: #{tpu_custom_call.1} parent=47 // pred_check
          %p784 = pneg %p193
        $region62: #{tpu_custom_call.1} parent=47 // pred_check_branch
          %786 = sbr.rel (%p784) target = $region64
        $region63: #{tpu_custom_call.1} parent=47 // pred_region
          %s787 = smul.u32 3, %s23
          %s789 = ssub.s32 384, 384
          %790 = vsyncadd %s780, %s789
          %s791 = smul.addr %s787, 128
          %s792 = scalar_lea.hbm %s7, %s791
          %s793 = sshll.u32 %s783, 4
          %s794 = int_to_ptr.vmem [resolvable:$true] %s793
          %799 = dma.vmem_to_hbm [thread:$0]  %s794, 384, %s792, %s780, 128, 128, 8
        $region64: #{tpu_custom_call.1} parent=47 // pred_fallthru
          _
      $region48: #{tpu_custom_call.1} parent=5 // pred_fallthru
        _
      %p800 = scmp.le.s32.totalorder 2, %s18
      // Predicated region
      $region65: #{tpu_custom_call.1} parent=5 // pred_check
        %p801 = pneg %p800
      $region66: #{tpu_custom_call.1} parent=5 // pred_check_branch
        %803 = sbr.rel (%p801) target = $region68
      $region67: #{tpu_custom_call.1} parent=5 // pred_region
        %s804 = ssub.s32 %s18, 2
        // Predicated region
        $region69: #{tpu_custom_call.1} parent=67 // pred_check
          %p805 = pneg %p199
        $region70: #{tpu_custom_call.1} parent=67 // pred_check_branch
          %807 = sbr.rel (%p805) target = $region72
        $region71: #{tpu_custom_call.1} parent=67 // pred_region
          %s808 = sand.u32 %s184, 1
          %s809 = scalar_lea.sflag [#allocation4], %s808
          %s810 = sand.u32 %s184, 1
          %s811 = smul.addr %s810, 24
          %s812 = scalar_lea.vmem [#allocation8], %s811
          %813 = dma.done %s809, 384
        $region72: #{tpu_custom_call.1} parent=67 // pred_fallthru
          _
      $region68: #{tpu_custom_call.1} parent=5 // pred_fallthru
        _
    $region6: #{tpu_custom_call.1} parent=1 // loop_footer
      %s22 = sadd.s32 1, %s18
    $region7: #{tpu_custom_call.1} parent=1 // loop_footer_branch
      %17 = sbr.rel target = $region3
    $region8: #{tpu_custom_call.1} parent=1 // loop_exit
      _
    %814 = vsyncpa [#allocation3], 1
    %s815 = scalar_lea.sflag [#allocation3], 1
    %816 = vsyncpa %s815, 1
    %817 = vsyncpa [#allocation6], 1
    %818 = vsyncpa [#allocation4], 1
    %s819 = scalar_lea.sflag [#allocation4], 1
    %820 = vsyncpa %s819, 1

</llo_original>
